<compile_context>
chip_gen: v5e
topology: v5e:2x2
jax: 0.10.0
libtpu: 0.0.40
codegen_flags: <defaults>
</compile_context>

<pallas_src>
import functools

import jax
import jax.numpy as jnp
from jax import lax
from jax.experimental import pallas as pl
from jax.experimental.pallas import tpu as pltpu

C_PAD = 128          # lane-dense channel padding for both conv outputs
C_OUT = 16           # true channel count of both convs
K1_K, K1_S, K1_P = 9, 7, 4   # conv1 kernel / stride / padding
K2_K, K2_P = 3, 1            # conv2 kernel / padding (stride 1)


def _round_up(x, m):
    return (x + m - 1) // m * m


# ---------------------------------------------------------------------------
# Fused whole-network kernel: one grid step == one image, fully VMEM-resident
# ---------------------------------------------------------------------------
def _encoder_kernel(p1_ref, w1_ref, b1_ref, w2_ref, b2_ref, o_ref, hpad_ref,
                    *, H, W):
    # ---- layer 1: 9x9 / stride-7 conv as one bf16 MXU matmul + bias + ReLU --
    h = jnp.dot(p1_ref[0], w1_ref[...], preferred_element_type=jnp.float32)
    h = jnp.maximum(h + b1_ref[...], 0.0)                      # [H*W, C_PAD] f32

    # ---- stage into zero-padded spatial scratch (halo = conv2 padding 1) ----
    hpad_ref[...] = jnp.zeros_like(hpad_ref)
    hpad_ref[1:H + 1, 1:W + 1, :] = h.reshape(H, W, h.shape[-1])

    # ---- layer 2: 3x3 / stride-1 conv = 9 accumulated shifted matmuls -------
    acc = jnp.zeros((H * W, o_ref.shape[-1]), jnp.float32)
    for dh in range(K2_K):
        for dw in range(K2_K):
            win = hpad_ref[dh:dh + H, dw:dw + W, :]             # [H, W, C_PAD]
            win = win.reshape(H * W, win.shape[-1]).astype(jnp.bfloat16)
            acc = acc + jnp.dot(win, w2_ref[dh * K2_K + dw],
                                preferred_element_type=jnp.float32)
    o_ref[0] = jnp.maximum(acc + b2_ref[...], 0.0)              # ReLU epilogue


def _encoder_pallas(patches, pk, N, Ho, Wo):
    M = Ho * Wo
    K1p = patches.shape[-1]
    C1p = pk["w1"].shape[-1]
    C2p = pk["w2"].shape[-1]

    flops = N * (2 * M * K1p * C1p + 2 * K2_K * K2_K * M * C1p * C2p)
    bytes_accessed = (patches.size * 2 + pk["w1"].size * 2 + pk["w2"].size * 2
                      + pk["b1"].size * 4 + pk["b2"].size * 4
                      + N * M * C2p * 4)

    return pl.pallas_call(
        functools.partial(_encoder_kernel, H=Ho, W=Wo),
        grid=(N,),
        in_specs=[
            pl.BlockSpec((1, M, K1p), lambda n: (n, 0, 0)),    # per-image patches
            pl.BlockSpec((K1p, C1p), lambda n: (0, 0)),        # conv1 weights
            pl.BlockSpec((1, C1p), lambda n: (0, 0)),          # conv1 bias
            pl.BlockSpec((K2_K * K2_K, C1p, C2p),
                         lambda n: (0, 0, 0)),                 # conv2 taps
            pl.BlockSpec((1, C2p), lambda n: (0, 0)),          # conv2 bias
        ],
        out_specs=pl.BlockSpec((1, M, C2p), lambda n: (n, 0, 0)),
        out_shape=jax.ShapeDtypeStruct((N, M, C2p), jnp.float32),
        scratch_shapes=[pltpu.VMEM((Ho + 2, Wo + 2, C1p), jnp.float32)],
        compiler_params=pltpu.CompilerParams(dimension_semantics=("parallel",)),
        cost_estimate=pl.CostEstimate(flops=flops, transcendentals=0,
                                      bytes_accessed=bytes_accessed),
    )(patches, pk["w1"], pk["b1"], pk["w2"], pk["b2"])


# ---------------------------------------------------------------------------
# XLA glue: im2col for the strided 9x9 conv (pure data movement)
# ---------------------------------------------------------------------------
def _im2col_conv1(x_nhwc):
    N, H, W, C = x_nhwc.shape
    xp = jnp.pad(x_nhwc, ((0, 0), (K1_P, K1_P), (K1_P, K1_P), (0, 0)))
    Ho = (H + 2 * K1_P - K1_K) // K1_S + 1
    Wo = (W + 2 * K1_P - K1_K) // K1_S + 1
    cols = []
    for dh in range(K1_K):
        for dw in range(K1_K):
            cols.append(xp[:, dh:dh + Ho * K1_S:K1_S,
                            dw:dw + Wo * K1_S:K1_S, :])
    patches = jnp.concatenate(cols, axis=-1)            # [N, Ho, Wo, 9*9*C]
    return patches.reshape(N, Ho * Wo, K1_K * K1_K * C), Ho, Wo


# ---------------------------------------------------------------------------
# Model
# ---------------------------------------------------------------------------
def init_params(key):
    k1, k2, k3, k4 = jax.random.split(key, 4)
    return {
        "w1": 0.05 * jax.random.normal(k1, (C_OUT, 3, K1_K, K1_K), jnp.float32),
        "b1": 0.02 * jax.random.normal(k2, (C_OUT,), jnp.float32),
        "w2": 0.08 * jax.random.normal(k3, (C_OUT, C_OUT, K2_K, K2_K), jnp.float32),
        "b2": 0.02 * jax.random.normal(k4, (C_OUT,), jnp.float32),
    }


def pack_params(params):
    """One-time weight prep (outside jit): transpose to matmul layout, pad
    channels to lane-dense 128, cast matmul operands to bf16 (biases stay f32
    for the f32 epilogue)."""
    w1, b1, w2, b2 = params["w1"], params["b1"], params["w2"], params["b2"]
    K1 = K1_K * K1_K * w1.shape[1]
    K1p = _round_up(K1, 128)
    w1p = jnp.transpose(w1, (2, 3, 1, 0)).reshape(K1, C_OUT)   # [(kh,kw,ci), co]
    w1p = jnp.pad(w1p, ((0, K1p - K1), (0, C_PAD - C_OUT))).astype(jnp.bfloat16)
    b1p = jnp.pad(b1, (0, C_PAD - C_OUT)).reshape(1, C_PAD).astype(jnp.float32)
    w2p = jnp.transpose(w2, (2, 3, 1, 0)).reshape(K2_K * K2_K, C_OUT, C_OUT)
    w2p = jnp.pad(w2p, ((0, 0), (0, C_PAD - C_OUT),
                        (0, C_PAD - C_OUT))).astype(jnp.bfloat16)
    b2p = jnp.pad(b2, (0, C_PAD - C_OUT)).reshape(1, C_PAD).astype(jnp.float32)
    return {"w1": w1p, "b1": b1p, "w2": w2p, "b2": b2p}


@jax.jit
def forward(packed, x_nchw):
    x = jnp.transpose(x_nchw, (0, 2, 3, 1))              # NCHW -> NHWC
    N = x.shape[0]
    patches, Ho, Wo = _im2col_conv1(x)
    K1 = patches.shape[-1]
    K1p = packed["w1"].shape[0]
    patches = jnp.pad(patches, ((0, 0), (0, 0), (0, K1p - K1)))
    patches = patches.astype(jnp.bfloat16)               # bf16 MXU operands
    out = _encoder_pallas(patches, packed, N, Ho, Wo)    # [N, Ho*Wo, C_PAD] f32
    y = out[:, :, :C_OUT].reshape(N, Ho, Wo, C_OUT)
    return jnp.transpose(y, (0, 3, 1, 2))                # NHWC -> NCHW


# ---------------------------------------------------------------------------
# Pure-JAX reference for correctness checking
# ---------------------------------------------------------------------------
def reference_forward(params, x_nchw):
    dn = ("NCHW", "OIHW", "NCHW")
    y = lax.conv_general_dilated(x_nchw, params["w1"], (K1_S, K1_S),
                                 [(K1_P, K1_P), (K1_P, K1_P)],
                                 dimension_numbers=dn,
                                 precision=lax.Precision.HIGHEST)
    y = jnp.maximum(y + params["b1"][None, :, None, None], 0.0)
    y = lax.conv_general_dilated(y, params["w2"], (1, 1),
                                 [(K2_P, K2_P), (K2_P, K2_P)],
                                 dimension_numbers=dn,
                                 precision=lax.Precision.HIGHEST)
    return jnp.maximum(y + params["b2"][None, :, None, None], 0.0)


if __name__ == "__main__":
    key = jax.random.PRNGKey(0)
    pkey, xkey = jax.random.split(key)
    params = init_params(pkey)
    packed = pack_params(params)                 # one-time weight prep

    # 56x56 input -> conv1(9x9, s7, p4) -> 8x8 -> conv2(3x3, s1, p1) -> 8x8
    x = jax.random.normal(xkey, (2, 3, 56, 56), jnp.float32)   # NCHW

    out = jax.block_until_ready(forward(packed, x))

    assert out.shape == (2, 16, 8, 8), out.shape
    assert bool(jnp.all(jnp.isfinite(out)))
    assert bool(jnp.all(out >= 0.0))             # ReLU output range

    ref = reference_forward(params, x)
    assert bool(jnp.allclose(out, ref, atol=1e-1, rtol=1e-1)), (
        float(jnp.max(jnp.abs(out - ref))))

    print("KERNEL_OK")
</pallas_src>

<mosaic_0001>
module attributes {stable_mosaic.version = 11 : i64} {
  func.func @_encoder_kernel(%arg0: i32, %arg1: memref<1x64x256xbf16, #tpu.memory_space<vmem>>, %arg2: memref<256x128xbf16, #tpu.memory_space<vmem>>, %arg3: memref<1x128xf32, #tpu.memory_space<vmem>>, %arg4: memref<9x128x128xbf16, #tpu.memory_space<vmem>>, %arg5: memref<1x128xf32, #tpu.memory_space<vmem>>, %arg6: memref<1x64x128xf32, #tpu.memory_space<vmem>>, %arg7: memref<10x10x128xf32, #tpu.memory_space<vmem>>) attributes {dimension_semantics = [#tpu.dimension_semantics<parallel>], iteration_bounds = array<i64: 2>, scalar_prefetch = 0 : i64, scratch_operands = 1 : i64, tpu.core_type = #tpu.core_type<tc>, window_params = [{transform_indices = @transform_0, window_bounds = array<i64: 1, 64, 256>}, {pipeline_mode = #tpu.pipeline_mode<synchronous>, transform_indices = @transform_1, window_bounds = array<i64: 256, 128>}, {pipeline_mode = #tpu.pipeline_mode<synchronous>, transform_indices = @transform_2, window_bounds = array<i64: 1, 128>}, {pipeline_mode = #tpu.pipeline_mode<synchronous>, transform_indices = @transform_3, window_bounds = array<i64: 9, 128, 128>}, {pipeline_mode = #tpu.pipeline_mode<synchronous>, transform_indices = @transform_4, window_bounds = array<i64: 1, 128>}, {transform_indices = @transform_5, window_bounds = array<i64: 1, 64, 128>}]} {
    %c0 = arith.constant 0 : index
    %c0_0 = arith.constant 0 : index
    %c0_1 = arith.constant 0 : index
    %0 = vector.load %arg1[%c0, %c0_0, %c0_1] : memref<1x64x256xbf16, #tpu.memory_space<vmem>>, vector<1x64x256xbf16>
    %1 = vector.shape_cast %0 : vector<1x64x256xbf16> to vector<64x256xbf16>
    %c0_2 = arith.constant 0 : index
    %c0_3 = arith.constant 0 : index
    %2 = vector.load %arg2[%c0_2, %c0_3] : memref<256x128xbf16, #tpu.memory_space<vmem>>, vector<256x128xbf16>
    %cst = arith.constant dense<0.000000e+00> : vector<64x128xf32>
    %3 = tpu.matmul %1, %2, %cst {dimension_numbers = #tpu.dot_dimension_numbers<[1], [0], [0], [1], [0, 0, 1, 1], [], []>} : vector<64x256xbf16>, vector<256x128xbf16>, vector<64x128xf32> -> vector<64x128xf32>
    %c0_4 = arith.constant 0 : index
    %c0_5 = arith.constant 0 : index
    %4 = vector.load %arg3[%c0_4, %c0_5] : memref<1x128xf32, #tpu.memory_space<vmem>>, vector<1x128xf32>
    %5 = vector.broadcast %4 : vector<1x128xf32> to vector<64x128xf32>
    %6 = arith.addf %3, %5 : vector<64x128xf32>
    %cst_6 = arith.constant 0.000000e+00 : f32
    %7 = vector.broadcast %cst_6 : f32 to vector<64x128xf32>
    %8 = arith.maximumf %6, %7 : vector<64x128xf32>
    %cst_7 = arith.constant 0.000000e+00 : f32
    %9 = vector.broadcast %cst_7 : f32 to vector<10x10x128xf32>
    %c0_8 = arith.constant 0 : index
    %c0_9 = arith.constant 0 : index
    %c0_10 = arith.constant 0 : index
    %10 = vector.load %arg7[%c0_8, %c0_9, %c0_10] : memref<10x10x128xf32, #tpu.memory_space<vmem>>, vector<10x10x128xf32>
    tpu.vector_store %arg7[%c0_8, %c0_9, %c0_10], %9 {strides = array<i32>} : memref<10x10x128xf32, #tpu.memory_space<vmem>>, vector<10x10x128xf32>,
    %11 = vector.shape_cast %8 : vector<64x128xf32> to vector<8x8x128xf32>
    %c1 = arith.constant 1 : index
    %c1_11 = arith.constant 1 : index
    %c0_12 = arith.constant 0 : index
    %12 = vector.load %arg7[%c1, %c1_11, %c0_12] : memref<10x10x128xf32, #tpu.memory_space<vmem>>, vector<8x8x128xf32>
    tpu.vector_store %arg7[%c1, %c1_11, %c0_12], %11 {strides = array<i32>} : memref<10x10x128xf32, #tpu.memory_space<vmem>>, vector<8x8x128xf32>,
    %cst_13 = arith.constant 0.000000e+00 : f32
    %13 = vector.broadcast %cst_13 : f32 to vector<64x128xf32>
    %c0_14 = arith.constant 0 : index
    %c0_15 = arith.constant 0 : index
    %c0_16 = arith.constant 0 : index
    %14 = vector.load %arg7[%c0_14, %c0_15, %c0_16] : memref<10x10x128xf32, #tpu.memory_space<vmem>>, vector<8x8x128xf32>
    %15 = vector.shape_cast %14 : vector<8x8x128xf32> to vector<64x128xf32>
    %16 = arith.truncf %15 : vector<64x128xf32> to vector<64x128xbf16>
    %c0_17 = arith.constant 0 : index
    %c0_18 = arith.constant 0 : index
    %c0_19 = arith.constant 0 : index
    %17 = vector.load %arg4[%c0_17, %c0_18, %c0_19] : memref<9x128x128xbf16, #tpu.memory_space<vmem>>, vector<1x128x128xbf16>
    %18 = vector.shape_cast %17 : vector<1x128x128xbf16> to vector<128x128xbf16>
    %cst_20 = arith.constant dense<0.000000e+00> : vector<64x128xf32>
    %19 = tpu.matmul %16, %18, %cst_20 {dimension_numbers = #tpu.dot_dimension_numbers<[1], [0], [0], [1], [0, 0, 1, 1], [], []>} : vector<64x128xbf16>, vector<128x128xbf16>, vector<64x128xf32> -> vector<64x128xf32>
    %20 = arith.addf %13, %19 : vector<64x128xf32>
    %c0_21 = arith.constant 0 : index
    %c1_22 = arith.constant 1 : index
    %c0_23 = arith.constant 0 : index
    %21 = vector.load %arg7[%c0_21, %c1_22, %c0_23] : memref<10x10x128xf32, #tpu.memory_space<vmem>>, vector<8x8x128xf32>
    %22 = vector.shape_cast %21 : vector<8x8x128xf32> to vector<64x128xf32>
    %23 = arith.truncf %22 : vector<64x128xf32> to vector<64x128xbf16>
    %c1_24 = arith.constant 1 : index
    %c0_25 = arith.constant 0 : index
    %c0_26 = arith.constant 0 : index
    %24 = vector.load %arg4[%c1_24, %c0_25, %c0_26] : memref<9x128x128xbf16, #tpu.memory_space<vmem>>, vector<1x128x128xbf16>
    %25 = vector.shape_cast %24 : vector<1x128x128xbf16> to vector<128x128xbf16>
    %cst_27 = arith.constant dense<0.000000e+00> : vector<64x128xf32>
    %26 = tpu.matmul %23, %25, %cst_27 {dimension_numbers = #tpu.dot_dimension_numbers<[1], [0], [0], [1], [0, 0, 1, 1], [], []>} : vector<64x128xbf16>, vector<128x128xbf16>, vector<64x128xf32> -> vector<64x128xf32>
    %27 = arith.addf %20, %26 : vector<64x128xf32>
    %c0_28 = arith.constant 0 : index
    %c2 = arith.constant 2 : index
    %c0_29 = arith.constant 0 : index
    %28 = vector.load %arg7[%c0_28, %c2, %c0_29] : memref<10x10x128xf32, #tpu.memory_space<vmem>>, vector<8x8x128xf32>
    %29 = vector.shape_cast %28 : vector<8x8x128xf32> to vector<64x128xf32>
    %30 = arith.truncf %29 : vector<64x128xf32> to vector<64x128xbf16>
    %c2_30 = arith.constant 2 : index
    %c0_31 = arith.constant 0 : index
    %c0_32 = arith.constant 0 : index
    %31 = vector.load %arg4[%c2_30, %c0_31, %c0_32] : memref<9x128x128xbf16, #tpu.memory_space<vmem>>, vector<1x128x128xbf16>
    %32 = vector.shape_cast %31 : vector<1x128x128xbf16> to vector<128x128xbf16>
    %cst_33 = arith.constant dense<0.000000e+00> : vector<64x128xf32>
    %33 = tpu.matmul %30, %32, %cst_33 {dimension_numbers = #tpu.dot_dimension_numbers<[1], [0], [0], [1], [0, 0, 1, 1], [], []>} : vector<64x128xbf16>, vector<128x128xbf16>, vector<64x128xf32> -> vector<64x128xf32>
    %34 = arith.addf %27, %33 : vector<64x128xf32>
    %c1_34 = arith.constant 1 : index
    %c0_35 = arith.constant 0 : index
    %c0_36 = arith.constant 0 : index
    %35 = vector.load %arg7[%c1_34, %c0_35, %c0_36] : memref<10x10x128xf32, #tpu.memory_space<vmem>>, vector<8x8x128xf32>
    %36 = vector.shape_cast %35 : vector<8x8x128xf32> to vector<64x128xf32>
    %37 = arith.truncf %36 : vector<64x128xf32> to vector<64x128xbf16>
    %c3 = arith.constant 3 : index
    %c0_37 = arith.constant 0 : index
    %c0_38 = arith.constant 0 : index
    %38 = vector.load %arg4[%c3, %c0_37, %c0_38] : memref<9x128x128xbf16, #tpu.memory_space<vmem>>, vector<1x128x128xbf16>
    %39 = vector.shape_cast %38 : vector<1x128x128xbf16> to vector<128x128xbf16>
    %cst_39 = arith.constant dense<0.000000e+00> : vector<64x128xf32>
    %40 = tpu.matmul %37, %39, %cst_39 {dimension_numbers = #tpu.dot_dimension_numbers<[1], [0], [0], [1], [0, 0, 1, 1], [], []>} : vector<64x128xbf16>, vector<128x128xbf16>, vector<64x128xf32> -> vector<64x128xf32>
    %41 = arith.addf %34, %40 : vector<64x128xf32>
    %c1_40 = arith.constant 1 : index
    %c1_41 = arith.constant 1 : index
    %c0_42 = arith.constant 0 : index
    %42 = vector.load %arg7[%c1_40, %c1_41, %c0_42] : memref<10x10x128xf32, #tpu.memory_space<vmem>>, vector<8x8x128xf32>
    %43 = vector.shape_cast %42 : vector<8x8x128xf32> to vector<64x128xf32>
    %44 = arith.truncf %43 : vector<64x128xf32> to vector<64x128xbf16>
    %c4 = arith.constant 4 : index
    %c0_43 = arith.constant 0 : index
    %c0_44 = arith.constant 0 : index
    %45 = vector.load %arg4[%c4, %c0_43, %c0_44] : memref<9x128x128xbf16, #tpu.memory_space<vmem>>, vector<1x128x128xbf16>
    %46 = vector.shape_cast %45 : vector<1x128x128xbf16> to vector<128x128xbf16>
    %cst_45 = arith.constant dense<0.000000e+00> : vector<64x128xf32>
    %47 = tpu.matmul %44, %46, %cst_45 {dimension_numbers = #tpu.dot_dimension_numbers<[1], [0], [0], [1], [0, 0, 1, 1], [], []>} : vector<64x128xbf16>, vector<128x128xbf16>, vector<64x128xf32> -> vector<64x128xf32>
    %48 = arith.addf %41, %47 : vector<64x128xf32>
    %c1_46 = arith.constant 1 : index
    %c2_47 = arith.constant 2 : index
    %c0_48 = arith.constant 0 : index
    %49 = vector.load %arg7[%c1_46, %c2_47, %c0_48] : memref<10x10x128xf32, #tpu.memory_space<vmem>>, vector<8x8x128xf32>
    %50 = vector.shape_cast %49 : vector<8x8x128xf32> to vector<64x128xf32>
    %51 = arith.truncf %50 : vector<64x128xf32> to vector<64x128xbf16>
    %c5 = arith.constant 5 : index
    %c0_49 = arith.constant 0 : index
    %c0_50 = arith.constant 0 : index
    %52 = vector.load %arg4[%c5, %c0_49, %c0_50] : memref<9x128x128xbf16, #tpu.memory_space<vmem>>, vector<1x128x128xbf16>
    %53 = vector.shape_cast %52 : vector<1x128x128xbf16> to vector<128x128xbf16>
    %cst_51 = arith.constant dense<0.000000e+00> : vector<64x128xf32>
    %54 = tpu.matmul %51, %53, %cst_51 {dimension_numbers = #tpu.dot_dimension_numbers<[1], [0], [0], [1], [0, 0, 1, 1], [], []>} : vector<64x128xbf16>, vector<128x128xbf16>, vector<64x128xf32> -> vector<64x128xf32>
    %55 = arith.addf %48, %54 : vector<64x128xf32>
    %c2_52 = arith.constant 2 : index
    %c0_53 = arith.constant 0 : index
    %c0_54 = arith.constant 0 : index
    %56 = vector.load %arg7[%c2_52, %c0_53, %c0_54] : memref<10x10x128xf32, #tpu.memory_space<vmem>>, vector<8x8x128xf32>
    %57 = vector.shape_cast %56 : vector<8x8x128xf32> to vector<64x128xf32>
    %58 = arith.truncf %57 : vector<64x128xf32> to vector<64x128xbf16>
    %c6 = arith.constant 6 : index
    %c0_55 = arith.constant 0 : index
    %c0_56 = arith.constant 0 : index
    %59 = vector.load %arg4[%c6, %c0_55, %c0_56] : memref<9x128x128xbf16, #tpu.memory_space<vmem>>, vector<1x128x128xbf16>
    %60 = vector.shape_cast %59 : vector<1x128x128xbf16> to vector<128x128xbf16>
    %cst_57 = arith.constant dense<0.000000e+00> : vector<64x128xf32>
    %61 = tpu.matmul %58, %60, %cst_57 {dimension_numbers = #tpu.dot_dimension_numbers<[1], [0], [0], [1], [0, 0, 1, 1], [], []>} : vector<64x128xbf16>, vector<128x128xbf16>, vector<64x128xf32> -> vector<64x128xf32>
    %62 = arith.addf %55, %61 : vector<64x128xf32>
    %c2_58 = arith.constant 2 : index
    %c1_59 = arith.constant 1 : index
    %c0_60 = arith.constant 0 : index
    %63 = vector.load %arg7[%c2_58, %c1_59, %c0_60] : memref<10x10x128xf32, #tpu.memory_space<vmem>>, vector<8x8x128xf32>
    %64 = vector.shape_cast %63 : vector<8x8x128xf32> to vector<64x128xf32>
    %65 = arith.truncf %64 : vector<64x128xf32> to vector<64x128xbf16>
    %c7 = arith.constant 7 : index
    %c0_61 = arith.constant 0 : index
    %c0_62 = arith.constant 0 : index
    %66 = vector.load %arg4[%c7, %c0_61, %c0_62] : memref<9x128x128xbf16, #tpu.memory_space<vmem>>, vector<1x128x128xbf16>
    %67 = vector.shape_cast %66 : vector<1x128x128xbf16> to vector<128x128xbf16>
    %cst_63 = arith.constant dense<0.000000e+00> : vector<64x128xf32>
    %68 = tpu.matmul %65, %67, %cst_63 {dimension_numbers = #tpu.dot_dimension_numbers<[1], [0], [0], [1], [0, 0, 1, 1], [], []>} : vector<64x128xbf16>, vector<128x128xbf16>, vector<64x128xf32> -> vector<64x128xf32>
    %69 = arith.addf %62, %68 : vector<64x128xf32>
    %c2_64 = arith.constant 2 : index
    %c2_65 = arith.constant 2 : index
    %c0_66 = arith.constant 0 : index
    %70 = vector.load %arg7[%c2_64, %c2_65, %c0_66] : memref<10x10x128xf32, #tpu.memory_space<vmem>>, vector<8x8x128xf32>
    %71 = vector.shape_cast %70 : vector<8x8x128xf32> to vector<64x128xf32>
    %72 = arith.truncf %71 : vector<64x128xf32> to vector<64x128xbf16>
    %c8 = arith.constant 8 : index
    %c0_67 = arith.constant 0 : index
    %c0_68 = arith.constant 0 : index
    %73 = vector.load %arg4[%c8, %c0_67, %c0_68] : memref<9x128x128xbf16, #tpu.memory_space<vmem>>, vector<1x128x128xbf16>
    %74 = vector.shape_cast %73 : vector<1x128x128xbf16> to vector<128x128xbf16>
    %cst_69 = arith.constant dense<0.000000e+00> : vector<64x128xf32>
    %75 = tpu.matmul %72, %74, %cst_69 {dimension_numbers = #tpu.dot_dimension_numbers<[1], [0], [0], [1], [0, 0, 1, 1], [], []>} : vector<64x128xbf16>, vector<128x128xbf16>, vector<64x128xf32> -> vector<64x128xf32>
    %76 = arith.addf %69, %75 : vector<64x128xf32>
    %c0_70 = arith.constant 0 : index
    %c0_71 = arith.constant 0 : index
    %77 = vector.load %arg5[%c0_70, %c0_71] : memref<1x128xf32, #tpu.memory_space<vmem>>, vector<1x128xf32>
    %78 = vector.broadcast %77 : vector<1x128xf32> to vector<64x128xf32>
    %79 = arith.addf %76, %78 : vector<64x128xf32>
    %cst_72 = arith.constant 0.000000e+00 : f32
    %80 = vector.broadcast %cst_72 : f32 to vector<64x128xf32>
    %81 = arith.maximumf %79, %80 : vector<64x128xf32>
    %c0_73 = arith.constant 0 : index
    %c0_74 = arith.constant 0 : index
    %c0_75 = arith.constant 0 : index
    %82 = vector.load %arg6[%c0_73, %c0_74, %c0_75] : memref<1x64x128xf32, #tpu.memory_space<vmem>>, vector<1x64x128xf32>
    %83 = vector.shape_cast %82 : vector<1x64x128xf32> to vector<64x128xf32>
    %84 = vector.shape_cast %81 : vector<64x128xf32> to vector<1x64x128xf32>
    tpu.vector_store %arg6[%c0_73, %c0_74, %c0_75], %84 {strides = array<i32>} : memref<1x64x128xf32, #tpu.memory_space<vmem>>, vector<1x64x128xf32>,
    return
  }
  func.func @transform_0(%arg0: i32) -> (i32, i32, i32) {
    %c0_i32 = arith.constant 0 : i32
    %c0_i32_0 = arith.constant 0 : i32
    %c0_i32_1 = arith.constant 0 : i32
    return %arg0, %c0_i32, %c0_i32_0 : i32, i32, i32
  }
  func.func @transform_1(%arg0: i32) -> (i32, i32) {
    %c0_i32 = arith.constant 0 : i32
    %c0_i32_0 = arith.constant 0 : i32
    %c0_i32_1 = arith.constant 0 : i32
    return %c0_i32, %c0_i32_0 : i32, i32
  }
  func.func @transform_2(%arg0: i32) -> (i32, i32) {
    %c0_i32 = arith.constant 0 : i32
    %c0_i32_0 = arith.constant 0 : i32
    %c0_i32_1 = arith.constant 0 : i32
    return %c0_i32, %c0_i32_0 : i32, i32
  }
  func.func @transform_3(%arg0: i32) -> (i32, i32, i32) {
    %c0_i32 = arith.constant 0 : i32
    %c0_i32_0 = arith.constant 0 : i32
    %c0_i32_1 = arith.constant 0 : i32
    %c0_i32_2 = arith.constant 0 : i32
    return %c0_i32, %c0_i32_0, %c0_i32_1 : i32, i32, i32
  }
  func.func @transform_4(%arg0: i32) -> (i32, i32) {
    %c0_i32 = arith.constant 0 : i32
    %c0_i32_0 = arith.constant 0 : i32
    %c0_i32_1 = arith.constant 0 : i32
    return %c0_i32, %c0_i32_0 : i32, i32
  }
  func.func @transform_5(%arg0: i32) -> (i32, i32, i32) {
    %c0_i32 = arith.constant 0 : i32
    %c0_i32_0 = arith.constant 0 : i32
    %c0_i32_1 = arith.constant 0 : i32
    return %arg0, %c0_i32, %c0_i32_0 : i32, i32, i32
  }
}

</mosaic_0001>

<llo_original>
// kernel: forward.1
$region0: #{forward.1}
  #allocation0 [shape = 'u32[]', space=smem, size = 0x4, offset = 0x4, fixed_abs, tag = 'smem constant byte address 0x4 - core index']
  #allocation1 [shape = 'u32[72,128]{1,0:T(1,128)}', space=vmem, size = 0x9000, scoped, tag = 'internal scratch']
  #allocation2 [shape = 'f32[10,10,128]{2,1,0:T(8,128)}', space=vmem, size = 0x14000, scoped, tag = 'scratch operand']
  %s0 = inlined_call_operand.vmem [shape: bf16[2,64,256], index: 0, kind: input, shape index: {}]
  %s1 = inlined_call_operand.vmem [shape: bf16[256,128], index: 1, kind: input, shape index: {}]
  %s2 = inlined_call_operand.vmem [shape: f32[1,128], index: 2, kind: input, shape index: {}]
  %s3 = inlined_call_operand.vmem [shape: bf16[9,128,128], index: 3, kind: input, shape index: {}]
  %s4 = inlined_call_operand.vmem [shape: f32[1,128], index: 4, kind: input, shape index: {}]
  %s5 = inlined_call_operand.vmem [shape: f32[2,64,128], index: 5, kind: output, shape index: {}]
  %s6 = sld [smem:[#allocation0]]
  $region53: #{forward.1} parent=0
    _
  %s8 = ssub.s32 1, %s6
  %s9 = scalar_select 0, %s8, %s6
  loop: start=0, step=1, limit=4
  $region2: #{forward.1} parent=0 // loop_pre_header
    _
  $region3: #{forward.1} parent=0 // loop_header
    %s11 = sphi 0, %s15
    %p12 = scmp.ge.s32.totalorder %s11, 4
    %s21 = sphi 0, %s23
    %s24 = sphi 0, %s21
    %s25 = sphi 0, %s24
    %s41 = sphi 0, %s25
    %s45 = sphi 0, %s45
    %s47 = sphi 0, %s45
    %s48 = sphi 0, %s47
    %s62 = sphi 0, %s48
    %s66 = sphi 0, %s66
    %s68 = sphi 0, %s66
    %s69 = sphi 0, %s68
    %s83 = sphi 0, %s69
    %s87 = sphi 0, %s87
    %s89 = sphi 0, %s87
    %s90 = sphi 0, %s89
    %s104 = sphi 0, %s90
    %s108 = sphi 0, %s108
    %s110 = sphi 0, %s108
    %s111 = sphi 0, %s110
    %s125 = sphi 0, %s111
    %s131 = sphi 0, %s133
    %s134 = sphi 0, %s131
    %s135 = sphi 0, %s134
    %s151 = sphi 0, %s135
  $region4: #{forward.1} parent=0 // loop_header_branch
    %14 = sbr.rel (%p12) target = $region8
  $region5: #{forward.1} parent=0 // loop_body
    %s16 = ssub.s32 %s11, 1
    %s17 = ssub.s32 %s11, 2
    %s18 = sadd.s32 %s11, 1
    %s19 = ssub.s32 %s11, %s18
    %p20 = scmp.eq.s32.totalorder %s19, 0
    %s22 = sadd.s32 %s21, 1
    %s23 = scalar_select %p20, %s21, %s22
    %p26 = pneg %p20
    %p27 = scmp.eq.s32.totalorder %s11, 1
    %p28 = por %p26, %p27
    %p29 = scmp.ne.s32.totalorder %s21, %s24
    %p30 = scmp.eq.s32.totalorder %s11, 0
    %p31 = por %p29, %p30
    %p32 = scmp.ne.s32.totalorder %s21, %s24
    %p33 = scmp.eq.s32.totalorder %s16, 1
    %p34 = por %p32, %p33
    %p35 = scmp.ne.s32.totalorder %s24, %s25
    %p36 = scmp.eq.s32.totalorder %s16, 0
    %p37 = por %p35, %p36
    %p38 = scmp.ne.s32.totalorder %s24, %s25
    %p39 = scmp.eq.s32.totalorder %s17, 1
    %p40 = por %p38, %p39
    %p42 = scmp.ne.s32.totalorder %s25, %s41
    %p43 = scmp.eq.s32.totalorder %s17, 0
    %p44 = por %p42, %p43
    %s46 = sadd.s32 %s45, 1
    %p49 = scmp.eq.s32.totalorder %s11, 1
    %p50 = scmp.ne.s32.totalorder %s45, %s47
    %p51 = scmp.eq.s32.totalorder %s11, 0
    %p52 = por %p50, %p51
    %p53 = scmp.ne.s32.totalorder %s45, %s47
    %p54 = scmp.eq.s32.totalorder %s16, 1
    %p55 = por %p53, %p54
    %p56 = scmp.ne.s32.totalorder %s47, %s48
    %p57 = scmp.eq.s32.totalorder %s16, 0
    %p58 = por %p56, %p57
    %p59 = scmp.ne.s32.totalorder %s47, %s48
    %p60 = scmp.eq.s32.totalorder %s17, 1
    %p61 = por %p59, %p60
    %p63 = scmp.ne.s32.totalorder %s48, %s62
    %p64 = scmp.eq.s32.totalorder %s17, 0
    %p65 = por %p63, %p64
    %s67 = sadd.s32 %s66, 1
    %p70 = scmp.eq.s32.totalorder %s11, 1
    %p71 = scmp.ne.s32.totalorder %s66, %s68
    %p72 = scmp.eq.s32.totalorder %s11, 0
    %p73 = por %p71, %p72
    %p74 = scmp.ne.s32.totalorder %s66, %s68
    %p75 = scmp.eq.s32.totalorder %s16, 1
    %p76 = por %p74, %p75
    %p77 = scmp.ne.s32.totalorder %s68, %s69
    %p78 = scmp.eq.s32.totalorder %s16, 0
    %p79 = por %p77, %p78
    %p80 = scmp.ne.s32.totalorder %s68, %s69
    %p81 = scmp.eq.s32.totalorder %s17, 1
    %p82 = por %p80, %p81
    %p84 = scmp.ne.s32.totalorder %s69, %s83
    %p85 = scmp.eq.s32.totalorder %s17, 0
    %p86 = por %p84, %p85
    %s88 = sadd.s32 %s87, 1
    %p91 = scmp.eq.s32.totalorder %s11, 1
    %p92 = scmp.ne.s32.totalorder %s87, %s89
    %p93 = scmp.eq.s32.totalorder %s11, 0
    %p94 = por %p92, %p93
    %p95 = scmp.ne.s32.totalorder %s87, %s89
    %p96 = scmp.eq.s32.totalorder %s16, 1
    %p97 = por %p95, %p96
    %p98 = scmp.ne.s32.totalorder %s89, %s90
    %p99 = scmp.eq.s32.totalorder %s16, 0
    %p100 = por %p98, %p99
    %p101 = scmp.ne.s32.totalorder %s89, %s90
    %p102 = scmp.eq.s32.totalorder %s17, 1
    %p103 = por %p101, %p102
    %p105 = scmp.ne.s32.totalorder %s90, %s104
    %p106 = scmp.eq.s32.totalorder %s17, 0
    %p107 = por %p105, %p106
    %s109 = sadd.s32 %s108, 1
    %p112 = scmp.eq.s32.totalorder %s11, 1
    %p113 = scmp.ne.s32.totalorder %s108, %s110
    %p114 = scmp.eq.s32.totalorder %s11, 0
    %p115 = por %p113, %p114
    %p116 = scmp.ne.s32.totalorder %s108, %s110
    %p117 = scmp.eq.s32.totalorder %s16, 1
    %p118 = por %p116, %p117
    %p119 = scmp.ne.s32.totalorder %s110, %s111
    %p120 = scmp.eq.s32.totalorder %s16, 0
    %p121 = por %p119, %p120
    %p122 = scmp.ne.s32.totalorder %s110, %s111
    %p123 = scmp.eq.s32.totalorder %s17, 1
    %p124 = por %p122, %p123
    %p126 = scmp.ne.s32.totalorder %s111, %s125
    %p127 = scmp.eq.s32.totalorder %s17, 0
    %p128 = por %p126, %p127
    %s129 = ssub.s32 %s11, %s18
    %p130 = scmp.eq.s32.totalorder %s129, 0
    %s132 = sadd.s32 %s131, 1
    %s133 = scalar_select %p130, %s131, %s132
    %p136 = pneg %p130
    %p137 = scmp.eq.s32.totalorder %s11, 1
    %p138 = por %p136, %p137
    %p139 = scmp.ne.s32.totalorder %s131, %s134
    %p140 = scmp.eq.s32.totalorder %s11, 0
    %p141 = por %p139, %p140
    %p142 = scmp.ne.s32.totalorder %s131, %s134
    %p143 = scmp.eq.s32.totalorder %s16, 1
    %p144 = por %p142, %p143
    %p145 = scmp.ne.s32.totalorder %s134, %s135
    %p146 = scmp.eq.s32.totalorder %s16, 0
    %p147 = por %p145, %p146
    %p148 = scmp.ne.s32.totalorder %s134, %s135
    %p149 = scmp.eq.s32.totalorder %s17, 1
    %p150 = por %p148, %p149
    %p152 = scmp.ne.s32.totalorder %s135, %s151
    %p153 = scmp.eq.s32.totalorder %s17, 0
    %p154 = por %p152, %p153
    %p155 = scmp.le.s32.totalorder 1, %s11
    %p156 = scmp.lt.s32.totalorder %s11, 3
    %p157 = pnand %p155, %p156
    %p158 = pneg %p157
    // Predicated region
    $region9: #{forward.1} parent=5 // pred_check
      _
    $region10: #{forward.1} parent=5 // pred_check_branch
      %160 = sbr.rel (%p157) target = $region12
    $region11: #{forward.1} parent=5 // pred_region
      %s161 = ssub.s32 %s11, 1
      // Predicated region
      $region13: #{forward.1} parent=11 // pred_check
        %p162 = pneg %p58
      $region14: #{forward.1} parent=11 // pred_check_branch
        %164 = sbr.rel (%p162) target = $region16
      $region15: #{forward.1} parent=11 // pred_region
        _
      $region16: #{forward.1} parent=11 // pred_fallthru
        _
      // Predicated region
      $region17: #{forward.1} parent=11 // pred_check
        %p165 = pneg %p79
      $region18: #{forward.1} parent=11 // pred_check_branch
        %167 = sbr.rel (%p165) target = $region20
      $region19: #{forward.1} parent=11 // pred_region
        _
      $region20: #{forward.1} parent=11 // pred_fallthru
        _
      // Predicated region
      $region21: #{forward.1} parent=11 // pred_check
        %p168 = pneg %p100
      $region22: #{forward.1} parent=11 // pred_check_branch
        %170 = sbr.rel (%p168) target = $region24
      $region23: #{forward.1} parent=11 // pred_region
        _
      $region24: #{forward.1} parent=11 // pred_fallthru
        _
      // Predicated region
      $region25: #{forward.1} parent=11 // pred_check
        %p171 = pneg %p121
      $region26: #{forward.1} parent=11 // pred_check_branch
        %173 = sbr.rel (%p171) target = $region28
      $region27: #{forward.1} parent=11 // pred_region
        _
      $region28: #{forward.1} parent=11 // pred_fallthru
        _
    $region12: #{forward.1} parent=5 // pred_fallthru
      _
    %p174 = scmp.lt.s32.totalorder %s11, 2
    // Predicated region
    $region29: #{forward.1} parent=5 // pred_check
      %p175 = pneg %p174
    $region30: #{forward.1} parent=5 // pred_check_branch
      %177 = sbr.rel (%p175) target = $region32
    $region31: #{forward.1} parent=5 // pred_region
      // Predicated region
      $region33: #{forward.1} parent=31 // pred_check
        %p178 = pneg %p31
      $region34: #{forward.1} parent=31 // pred_check_branch
        %180 = sbr.rel (%p178) target = $region36
      $region35: #{forward.1} parent=31 // pred_region
        %p181 = scmp.lt.s32.totalorder %s11, 1
        %s182 = scalar_select %p181, %s11, 1
        %s183 = smul.addr %s182, 16
        %s184 = smul.addr %s183, 4
        %s185 = scalar_lea.vmem %s0, %s184
      $region36: #{forward.1} parent=31 // pred_fallthru
        _
    $region32: #{forward.1} parent=5 // pred_fallthru
      _
    %p186 = scmp.le.s32.totalorder 1, %s11
    %p187 = scmp.lt.s32.totalorder %s11, 3
    %p188 = pnand %p186, %p187
    %p189 = pneg %p188
    // Predicated region
    $region37: #{forward.1} parent=5 // pred_check
      _
    $region38: #{forward.1} parent=5 // pred_check_branch
      %191 = sbr.rel (%p188) target = $region40
    $region39: #{forward.1} parent=5 // pred_region
      %s192 = ssub.s32 %s11, 1
      %p193 = scmp.lt.s32.totalorder %s16, 1
      %s194 = scalar_select %p193, %s16, 1
      %s195 = smul.addr %s194, 16
      %s196 = smul.addr %s195, 4
      %s197 = scalar_lea.vmem %s0, %s196
      %p198 = pneg %p37
      %p199 = pneg %p34
      %p200 = pneg %p58
      %p201 = pneg %p55
      %p202 = pneg %p79
      %p203 = pneg %p76
      %p204 = pneg %p100
      %p205 = pneg %p97
      %p206 = pneg %p121
      %p207 = pneg %p118
      %p208 = pneg %p147
      %p209 = pneg %p144
      %p210 = scmp.lt.s32.totalorder %s16, 1
      %s211 = scalar_select %p210, %s16, 1
      %s212 = smul.addr %s211, 8
      %s213 = smul.addr %s212, 8
      %s214 = scalar_lea.vmem %s5, %s213
      %p215 = scmp.lt.s32.totalorder %s16, 1
      %s216 = scalar_select %p215, %s16, 1
      %s217 = smul.addr %s216, 16
      %s218 = smul.addr %s217, 4
      %s219 = scalar_lea.vmem %s0, %s218
      %p220 = scmp.lt.s32.totalorder %s16, 1
      %s221 = scalar_select %p220, %s16, 1
      %s222 = smul.addr %s221, 8
      %s223 = smul.addr %s222, 8
      %s224 = scalar_lea.vmem %s5, %s223
      %v225 = vld [vmem:[%s219] sm:$0xff]
      %v226 = vld [vmem:[%s219 + $0x8] sm:$0xff]
      %v227 = vld [vmem:[%s219 + $0x10] sm:$0xff]
      %v228 = vld [vmem:[%s219 + $0x18] sm:$0xff]
      %v229 = vld [vmem:[%s219 + $0x20] sm:$0xff]
      %v230 = vld [vmem:[%s219 + $0x28] sm:$0xff]
      %v231 = vld [vmem:[%s219 + $0x30] sm:$0xff]
      %v232 = vld [vmem:[%s219 + $0x38] sm:$0xff]
      %v233 = vld [vmem:[%s1] sm:$0xf]
      %v234 = vld [vmem:[%s1 + $0x4] sm:$0xf]
      %v235 = vld [vmem:[%s1 + $0x8] sm:$0xf]
      %v236 = vld [vmem:[%s1 + $0xc] sm:$0xf]
      %v237 = vld [vmem:[%s1 + $0x10] sm:$0xf]
      %v238 = vld [vmem:[%s1 + $0x14] sm:$0xf]
      %v239 = vld [vmem:[%s1 + $0x18] sm:$0xf]
      %v240 = vld [vmem:[%s1 + $0x1c] sm:$0xf]
      %v241 = vld [vmem:[%s1 + $0x20] sm:$0xf]
      %v242 = vld [vmem:[%s1 + $0x24] sm:$0xf]
      %v243 = vld [vmem:[%s1 + $0x28] sm:$0xf]
      %v244 = vld [vmem:[%s1 + $0x2c] sm:$0xf]
      %v245 = vld [vmem:[%s1 + $0x30] sm:$0xf]
      %v246 = vld [vmem:[%s1 + $0x34] sm:$0xf]
      %v247 = vld [vmem:[%s1 + $0x38] sm:$0xf]
      %v248 = vld [vmem:[%s1 + $0x3c] sm:$0xf]
      %v249 = vld [vmem:[%s1 + $0x40] sm:$0xf]
      %v250 = vld [vmem:[%s1 + $0x44] sm:$0xf]
      %v251 = vld [vmem:[%s1 + $0x48] sm:$0xf]
      %v252 = vld [vmem:[%s1 + $0x4c] sm:$0xf]
      %v253 = vld [vmem:[%s1 + $0x50] sm:$0xf]
      %v254 = vld [vmem:[%s1 + $0x54] sm:$0xf]
      %v255 = vld [vmem:[%s1 + $0x58] sm:$0xf]
      %v256 = vld [vmem:[%s1 + $0x5c] sm:$0xf]
      %v257 = vld [vmem:[%s1 + $0x60] sm:$0xf]
      %v258 = vld [vmem:[%s1 + $0x64] sm:$0xf]
      %v259 = vld [vmem:[%s1 + $0x68] sm:$0xf]
      %v260 = vld [vmem:[%s1 + $0x6c] sm:$0xf]
      %v261 = vld [vmem:[%s1 + $0x70] sm:$0xf]
      %v262 = vld [vmem:[%s1 + $0x74] sm:$0xf]
      %v263 = vld [vmem:[%s1 + $0x78] sm:$0xf]
      %v264 = vld [vmem:[%s1 + $0x7c] sm:$0xf]
      %v265 = vld [vmem:[%s2] sm:$0x1]
      %v267 = vperm.slane %v265, 0
      %v277 = vunpack.c.l.b16 %v225
      %v278 = vunpack.c.h.b16 %v225
      %v279 = vunpack.c.l.b16 %v226
      %v280 = vunpack.c.h.b16 %v226
      %v281 = vunpack.c.l.b16 %v227
      %v282 = vunpack.c.h.b16 %v227
      %v283 = vunpack.c.l.b16 %v228
      %v284 = vunpack.c.h.b16 %v228
      %v285 = vunpack.c.l.b16 %v229
      %v286 = vunpack.c.h.b16 %v229
      %v287 = vunpack.c.l.b16 %v230
      %v288 = vunpack.c.h.b16 %v230
      %v289 = vunpack.c.l.b16 %v231
      %v290 = vunpack.c.h.b16 %v231
      %v291 = vunpack.c.l.b16 %v232
      %v292 = vunpack.c.h.b16 %v232
      %v293 = vpack.c.b16 %v279, %v277
      %v294 = vpack.c.b16 %v280, %v278
      %v295 = vpack.c.b16 %v283, %v281
      %v296 = vpack.c.b16 %v284, %v282
      %v297 = vpack.c.b16 %v287, %v285
      %v298 = vpack.c.b16 %v288, %v286
      %v299 = vpack.c.b16 %v291, %v289
      %v300 = vpack.c.b16 %v292, %v290
      %v341 = vunpack.c.l.b16 %v233
      %v342 = vunpack.c.l.b16 %v234
      %v343 = vunpack.c.l.b16 %v235
      %v344 = vunpack.c.l.b16 %v236
      %v345 = vunpack.c.l.b16 %v237
      %v346 = vunpack.c.l.b16 %v238
      %v347 = vunpack.c.l.b16 %v239
      %v348 = vunpack.c.l.b16 %v240
      %v349 = vunpack.c.l.b16 %v241
      %v350 = vunpack.c.l.b16 %v242
      %v351 = vunpack.c.l.b16 %v243
      %v352 = vunpack.c.l.b16 %v244
      %v353 = vunpack.c.l.b16 %v245
      %v354 = vunpack.c.l.b16 %v246
      %v355 = vunpack.c.l.b16 %v247
      %v356 = vunpack.c.l.b16 %v248
      %v357 = vunpack.c.l.b16 %v249
      %v358 = vunpack.c.l.b16 %v250
      %v359 = vunpack.c.l.b16 %v251
      %v360 = vunpack.c.l.b16 %v252
      %v361 = vunpack.c.l.b16 %v253
      %v362 = vunpack.c.l.b16 %v254
      %v363 = vunpack.c.l.b16 %v255
      %v364 = vunpack.c.l.b16 %v256
      %v365 = vunpack.c.l.b16 %v257
      %v366 = vunpack.c.l.b16 %v258
      %v367 = vunpack.c.l.b16 %v259
      %v368 = vunpack.c.l.b16 %v260
      %v369 = vunpack.c.l.b16 %v261
      %v370 = vunpack.c.l.b16 %v262
      %v371 = vunpack.c.l.b16 %v263
      %v372 = vunpack.c.l.b16 %v264
      %v373 = vpack.c.b16 %v342, %v341
      %v374 = vpack.c.b16 %v344, %v343
      %v375 = vpack.c.b16 %v346, %v345
      %v376 = vpack.c.b16 %v348, %v347
      %v377 = vpack.c.b16 %v350, %v349
      %v378 = vpack.c.b16 %v352, %v351
      %v379 = vpack.c.b16 %v354, %v353
      %v380 = vpack.c.b16 %v356, %v355
      %v381 = vpack.c.b16 %v358, %v357
      %v382 = vpack.c.b16 %v360, %v359
      %v383 = vpack.c.b16 %v362, %v361
      %v384 = vpack.c.b16 %v364, %v363
      %v385 = vpack.c.b16 %v366, %v365
      %v386 = vpack.c.b16 %v368, %v367
      %v387 = vpack.c.b16 %v370, %v369
      %v388 = vpack.c.b16 %v372, %v371
      %405 = vmatpush.bf16.msra.mxu0 %v380
      %406 = vmatpush.bf16.msra.mxu0 %v379
      %407 = vmatpush.bf16.msra.mxu0 %v378
      %408 = vmatpush.bf16.msra.mxu0 %v377
      %409 = vmatpush.bf16.msra.mxu0 %v376
      %410 = vmatpush.bf16.msra.mxu0 %v375
      %411 = vmatpush.bf16.msra.mxu0 %v374
      %412 = vmatpush.bf16.msra.mxu0 %v373
      %413 = vmatmul.bf16.gmra.mxu0 %v293
      %v414 = vpop.f32.mrf.mxu0
      %v415 = vadd.f32 %v267, %v414
      %v416 = vpop.f32.mrf.mxu0
      %v417 = vadd.f32 %v267, %v416
      %418 = vmatmul.bf16.gmra.mxu0 %v295
      %v419 = vpop.f32.mrf.mxu0
      %v420 = vadd.f32 %v267, %v419
      %v421 = vpop.f32.mrf.mxu0
      %v422 = vadd.f32 %v267, %v421
      %423 = vmatmul.bf16.gmra.mxu0 %v297
      %v424 = vpop.f32.mrf.mxu0
      %v425 = vadd.f32 %v267, %v424
      %v426 = vpop.f32.mrf.mxu0
      %v427 = vadd.f32 %v267, %v426
      %428 = vmatmul.bf16.gmra.mxu0 %v299
      %v429 = vpop.f32.mrf.mxu0
      %v430 = vadd.f32 %v267, %v429
      %v431 = vpop.f32.mrf.mxu0
      %v432 = vadd.f32 %v267, %v431
      %433 = vdwg.mxu0
      %434 = vmatpush.bf16.msra.mxu0 %v388
      %435 = vmatpush.bf16.msra.mxu0 %v387
      %436 = vmatpush.bf16.msra.mxu0 %v386
      %437 = vmatpush.bf16.msra.mxu0 %v385
      %438 = vmatpush.bf16.msra.mxu0 %v384
      %439 = vmatpush.bf16.msra.mxu0 %v383
      %440 = vmatpush.bf16.msra.mxu0 %v382
      %441 = vmatpush.bf16.msra.mxu0 %v381
      %442 = vmatmul.bf16.gmra.mxu0 %v294
      %v443 = vpop.f32.mrf.mxu0
      %v444 = vadd.f32 %v415, %v443
      %v445 = vpop.f32.mrf.mxu0
      %v446 = vadd.f32 %v417, %v445
      %447 = vmatmul.bf16.gmra.mxu0 %v296
      %v448 = vpop.f32.mrf.mxu0
      %v449 = vadd.f32 %v420, %v448
      %v450 = vpop.f32.mrf.mxu0
      %v451 = vadd.f32 %v422, %v450
      %452 = vmatmul.bf16.gmra.mxu0 %v298
      %v453 = vpop.f32.mrf.mxu0
      %v454 = vadd.f32 %v425, %v453
      %v455 = vpop.f32.mrf.mxu0
      %v456 = vadd.f32 %v427, %v455
      %457 = vmatmul.bf16.gmra.mxu0 %v300
      %v458 = vpop.f32.mrf.mxu0
      %v459 = vadd.f32 %v430, %v458
      %v460 = vpop.f32.mrf.mxu0
      %v461 = vadd.f32 %v432, %v460
      %462 = vdwg.mxu0
      %v463 = vmax.f32 %v444, 0.0
      %v464 = vmax.f32 %v446, 0.0
      %v465 = vmax.f32 %v449, 0.0
      %v466 = vmax.f32 %v451, 0.0
      %v467 = vmax.f32 %v454, 0.0
      %v468 = vmax.f32 %v456, 0.0
      %v469 = vmax.f32 %v459, 0.0
      %v470 = vmax.f32 %v461, 0.0
      %471 = vst [vmem:[#allocation2] sm:$0xff] 0.0
      %472 = vst [vmem:[#allocation2 + $0x8] sm:$0x3] 0.0
      %473 = vst [vmem:[#allocation2 + $0x10] sm:$0xff] 0.0
      %474 = vst [vmem:[#allocation2 + $0x18] sm:$0x3] 0.0
      %475 = vst [vmem:[#allocation2 + $0x20] sm:$0xff] 0.0
      %476 = vst [vmem:[#allocation2 + $0x28] sm:$0x3] 0.0
      %477 = vst [vmem:[#allocation2 + $0x30] sm:$0xff] 0.0
      %478 = vst [vmem:[#allocation2 + $0x38] sm:$0x3] 0.0
      %479 = vst [vmem:[#allocation2 + $0x40] sm:$0xff] 0.0
      %480 = vst [vmem:[#allocation2 + $0x48] sm:$0x3] 0.0
      %481 = vst [vmem:[#allocation2 + $0x50] sm:$0xff] 0.0
      %482 = vst [vmem:[#allocation2 + $0x58] sm:$0x3] 0.0
      %483 = vst [vmem:[#allocation2 + $0x60] sm:$0xff] 0.0
      %484 = vst [vmem:[#allocation2 + $0x68] sm:$0x3] 0.0
      %485 = vst [vmem:[#allocation2 + $0x70] sm:$0xff] 0.0
      %486 = vst [vmem:[#allocation2 + $0x78] sm:$0x3] 0.0
      %487 = vst [vmem:[#allocation2 + $0x80] sm:$0xff] 0.0
      %488 = vst [vmem:[#allocation2 + $0x88] sm:$0x3] 0.0
      %489 = vst [vmem:[#allocation2 + $0x90] sm:$0xff] 0.0
      %490 = vst [vmem:[#allocation2 + $0x98] sm:$0x3] 0.0
      %s491 = scalar_lea.vmem [#allocation2], 16
      %492 = vst [vmem:[%s491 + $0x1] sm:$0xff] %v463
      %493 = vst [vmem:[%s491 + $0x11] sm:$0xff] %v464
      %494 = vst [vmem:[%s491 + $0x21] sm:$0xff] %v465
      %495 = vst [vmem:[%s491 + $0x31] sm:$0xff] %v466
      %496 = vst [vmem:[%s491 + $0x41] sm:$0xff] %v467
      %497 = vst [vmem:[%s491 + $0x51] sm:$0xff] %v468
      %498 = vst [vmem:[%s491 + $0x61] sm:$0xff] %v469
      %499 = vst [vmem:[%s491 + $0x71] sm:$0xff] %v470
      %v500 = vld [vmem:[#allocation2] sm:$0xff]
      %v501 = vld [vmem:[#allocation2 + $0x10] sm:$0xff]
      %v502 = vld [vmem:[#allocation2 + $0x20] sm:$0xff]
      %v503 = vld [vmem:[#allocation2 + $0x30] sm:$0xff]
      %v504 = vld [vmem:[#allocation2 + $0x40] sm:$0xff]
      %v505 = vld [vmem:[#allocation2 + $0x50] sm:$0xff]
      %v506 = vld [vmem:[#allocation2 + $0x60] sm:$0xff]
      %v507 = vld [vmem:[#allocation2 + $0x70] sm:$0xff]
      %v508 = vpack.c.bf16 %v501, %v500
      %v509 = vpack.c.bf16 %v503, %v502
      %v510 = vpack.c.bf16 %v505, %v504
      %v511 = vpack.c.bf16 %v507, %v506
      %v512 = vld [vmem:[%s3] sm:$0xf]
      %v513 = vld [vmem:[%s3 + $0x4] sm:$0xf]
      %v514 = vld [vmem:[%s3 + $0x8] sm:$0xf]
      %v515 = vld [vmem:[%s3 + $0xc] sm:$0xf]
      %v516 = vld [vmem:[%s3 + $0x10] sm:$0xf]
      %v517 = vld [vmem:[%s3 + $0x14] sm:$0xf]
      %v518 = vld [vmem:[%s3 + $0x18] sm:$0xf]
      %v519 = vld [vmem:[%s3 + $0x1c] sm:$0xf]
      %v520 = vld [vmem:[%s3 + $0x20] sm:$0xf]
      %v521 = vld [vmem:[%s3 + $0x24] sm:$0xf]
      %v522 = vld [vmem:[%s3 + $0x28] sm:$0xf]
      %v523 = vld [vmem:[%s3 + $0x2c] sm:$0xf]
      %v524 = vld [vmem:[%s3 + $0x30] sm:$0xf]
      %v525 = vld [vmem:[%s3 + $0x34] sm:$0xf]
      %v526 = vld [vmem:[%s3 + $0x38] sm:$0xf]
      %v527 = vld [vmem:[%s3 + $0x3c] sm:$0xf]
      %v528 = vld [vmem:[#allocation2 + $0x1] sm:$0xff]
      %v529 = vld [vmem:[#allocation2 + $0x11] sm:$0xff]
      %v530 = vld [vmem:[#allocation2 + $0x21] sm:$0xff]
      %v531 = vld [vmem:[#allocation2 + $0x31] sm:$0xff]
      %v532 = vld [vmem:[#allocation2 + $0x41] sm:$0xff]
      %v533 = vld [vmem:[#allocation2 + $0x51] sm:$0xff]
      %v534 = vld [vmem:[#allocation2 + $0x61] sm:$0xff]
      %v535 = vld [vmem:[#allocation2 + $0x71] sm:$0xff]
      %v536 = vpack.c.bf16 %v529, %v528
      %v537 = vpack.c.bf16 %v531, %v530
      %v538 = vpack.c.bf16 %v533, %v532
      %v539 = vpack.c.bf16 %v535, %v534
      %s540 = scalar_lea.vmem %s3, 64
      %v541 = vld [vmem:[%s540] sm:$0xf]
      %v542 = vld [vmem:[%s540 + $0x4] sm:$0xf]
      %v543 = vld [vmem:[%s540 + $0x8] sm:$0xf]
      %v544 = vld [vmem:[%s540 + $0xc] sm:$0xf]
      %v545 = vld [vmem:[%s540 + $0x10] sm:$0xf]
      %v546 = vld [vmem:[%s540 + $0x14] sm:$0xf]
      %v547 = vld [vmem:[%s540 + $0x18] sm:$0xf]
      %v548 = vld [vmem:[%s540 + $0x1c] sm:$0xf]
      %v549 = vld [vmem:[%s540 + $0x20] sm:$0xf]
      %v550 = vld [vmem:[%s540 + $0x24] sm:$0xf]
      %v551 = vld [vmem:[%s540 + $0x28] sm:$0xf]
      %v552 = vld [vmem:[%s540 + $0x2c] sm:$0xf]
      %v553 = vld [vmem:[%s540 + $0x30] sm:$0xf]
      %v554 = vld [vmem:[%s540 + $0x34] sm:$0xf]
      %v555 = vld [vmem:[%s540 + $0x38] sm:$0xf]
      %v556 = vld [vmem:[%s540 + $0x3c] sm:$0xf]
      %v573 = vunpack.c.l.b16 %v541
      %v574 = vunpack.c.l.b16 %v542
      %v575 = vunpack.c.l.b16 %v543
      %v576 = vunpack.c.l.b16 %v544
      %v577 = vunpack.c.l.b16 %v545
      %v578 = vunpack.c.l.b16 %v546
      %v579 = vunpack.c.l.b16 %v547
      %v580 = vunpack.c.l.b16 %v548
      %v581 = vunpack.c.l.b16 %v549
      %v582 = vunpack.c.l.b16 %v550
      %v583 = vunpack.c.l.b16 %v551
      %v584 = vunpack.c.l.b16 %v552
      %v585 = vunpack.c.l.b16 %v553
      %v586 = vunpack.c.l.b16 %v554
      %v587 = vunpack.c.l.b16 %v555
      %v588 = vunpack.c.l.b16 %v556
      %v589 = vpack.c.b16 %v574, %v573
      %v590 = vpack.c.b16 %v576, %v575
      %v591 = vpack.c.b16 %v578, %v577
      %v592 = vpack.c.b16 %v580, %v579
      %v593 = vpack.c.b16 %v582, %v581
      %v594 = vpack.c.b16 %v584, %v583
      %v595 = vpack.c.b16 %v586, %v585
      %v596 = vpack.c.b16 %v588, %v587
      %605 = vmatpush.bf16.msra.mxu0 %v596
      %606 = vmatpush.bf16.msra.mxu0 %v595
      %607 = vmatpush.bf16.msra.mxu0 %v594
      %608 = vmatpush.bf16.msra.mxu0 %v593
      %609 = vmatpush.bf16.msra.mxu0 %v592
      %610 = vmatpush.bf16.msra.mxu0 %v591
      %611 = vmatpush.bf16.msra.mxu0 %v590
      %612 = vmatpush.bf16.msra.mxu0 %v589
      %613 = vmatmul.bf16.gmra.mxu0 %v536
      %v614 = vpop.f32.mrf.mxu0
      %v615 = vadd.f32 0.0, %v614
      %v616 = vpop.f32.mrf.mxu0
      %v617 = vadd.f32 0.0, %v616
      %618 = vmatmul.bf16.gmra.mxu0 %v537
      %v619 = vpop.f32.mrf.mxu0
      %v620 = vadd.f32 0.0, %v619
      %v621 = vpop.f32.mrf.mxu0
      %v622 = vadd.f32 0.0, %v621
      %623 = vmatmul.bf16.gmra.mxu0 %v538
      %v624 = vpop.f32.mrf.mxu0
      %v625 = vadd.f32 0.0, %v624
      %v626 = vpop.f32.mrf.mxu0
      %v627 = vadd.f32 0.0, %v626
      %628 = vmatmul.bf16.gmra.mxu0 %v539
      %v629 = vpop.f32.mrf.mxu0
      %v630 = vadd.f32 0.0, %v629
      %v631 = vpop.f32.mrf.mxu0
      %v632 = vadd.f32 0.0, %v631
      %633 = vdwg.mxu0
      %v650 = vunpack.c.l.b16 %v512
      %v651 = vunpack.c.l.b16 %v513
      %v652 = vunpack.c.l.b16 %v514
      %v653 = vunpack.c.l.b16 %v515
      %v654 = vunpack.c.l.b16 %v516
      %v655 = vunpack.c.l.b16 %v517
      %v656 = vunpack.c.l.b16 %v518
      %v657 = vunpack.c.l.b16 %v519
      %v658 = vunpack.c.l.b16 %v520
      %v659 = vunpack.c.l.b16 %v521
      %v660 = vunpack.c.l.b16 %v522
      %v661 = vunpack.c.l.b16 %v523
      %v662 = vunpack.c.l.b16 %v524
      %v663 = vunpack.c.l.b16 %v525
      %v664 = vunpack.c.l.b16 %v526
      %v665 = vunpack.c.l.b16 %v527
      %v666 = vpack.c.b16 %v651, %v650
      %v667 = vpack.c.b16 %v653, %v652
      %v668 = vpack.c.b16 %v655, %v654
      %v669 = vpack.c.b16 %v657, %v656
      %v670 = vpack.c.b16 %v659, %v658
      %v671 = vpack.c.b16 %v661, %v660
      %v672 = vpack.c.b16 %v663, %v662
      %v673 = vpack.c.b16 %v665, %v664
      %682 = vmatpush.bf16.msra.mxu0 %v673
      %683 = vmatpush.bf16.msra.mxu0 %v672
      %684 = vmatpush.bf16.msra.mxu0 %v671
      %685 = vmatpush.bf16.msra.mxu0 %v670
      %686 = vmatpush.bf16.msra.mxu0 %v669
      %687 = vmatpush.bf16.msra.mxu0 %v668
      %688 = vmatpush.bf16.msra.mxu0 %v667
      %689 = vmatpush.bf16.msra.mxu0 %v666
      %690 = vmatmul.bf16.gmra.mxu0 %v508
      %v691 = vpop.f32.mrf.mxu0
      %v692 = vadd.f32 %v615, %v691
      %v693 = vpop.f32.mrf.mxu0
      %v694 = vadd.f32 %v617, %v693
      %695 = vmatmul.bf16.gmra.mxu0 %v509
      %v696 = vpop.f32.mrf.mxu0
      %v697 = vadd.f32 %v620, %v696
      %v698 = vpop.f32.mrf.mxu0
      %v699 = vadd.f32 %v622, %v698
      %700 = vmatmul.bf16.gmra.mxu0 %v510
      %v701 = vpop.f32.mrf.mxu0
      %v702 = vadd.f32 %v625, %v701
      %v703 = vpop.f32.mrf.mxu0
      %v704 = vadd.f32 %v627, %v703
      %705 = vmatmul.bf16.gmra.mxu0 %v511
      %v706 = vpop.f32.mrf.mxu0
      %v707 = vadd.f32 %v630, %v706
      %v708 = vpop.f32.mrf.mxu0
      %v709 = vadd.f32 %v632, %v708
      %710 = vdwg.mxu0
      %v711 = vld [vmem:[#allocation2 + $0x2] sm:$0xff]
      %v712 = vld [vmem:[#allocation2 + $0x12] sm:$0xff]
      %v713 = vld [vmem:[#allocation2 + $0x22] sm:$0xff]
      %v714 = vld [vmem:[#allocation2 + $0x32] sm:$0xff]
      %v715 = vld [vmem:[#allocation2 + $0x42] sm:$0xff]
      %v716 = vld [vmem:[#allocation2 + $0x52] sm:$0xff]
      %v717 = vld [vmem:[#allocation2 + $0x62] sm:$0xff]
      %v718 = vld [vmem:[#allocation2 + $0x72] sm:$0xff]
      %v719 = vpack.c.bf16 %v712, %v711
      %v720 = vpack.c.bf16 %v714, %v713
      %v721 = vpack.c.bf16 %v716, %v715
      %v722 = vpack.c.bf16 %v718, %v717
      %s723 = scalar_lea.vmem %s3, 128
      %v724 = vld [vmem:[%s723] sm:$0xf]
      %v725 = vld [vmem:[%s723 + $0x4] sm:$0xf]
      %v726 = vld [vmem:[%s723 + $0x8] sm:$0xf]
      %v727 = vld [vmem:[%s723 + $0xc] sm:$0xf]
      %v728 = vld [vmem:[%s723 + $0x10] sm:$0xf]
      %v729 = vld [vmem:[%s723 + $0x14] sm:$0xf]
      %v730 = vld [vmem:[%s723 + $0x18] sm:$0xf]
      %v731 = vld [vmem:[%s723 + $0x1c] sm:$0xf]
      %v732 = vld [vmem:[%s723 + $0x20] sm:$0xf]
      %v733 = vld [vmem:[%s723 + $0x24] sm:$0xf]
      %v734 = vld [vmem:[%s723 + $0x28] sm:$0xf]
      %v735 = vld [vmem:[%s723 + $0x2c] sm:$0xf]
      %v736 = vld [vmem:[%s723 + $0x30] sm:$0xf]
      %v737 = vld [vmem:[%s723 + $0x34] sm:$0xf]
      %v738 = vld [vmem:[%s723 + $0x38] sm:$0xf]
      %v739 = vld [vmem:[%s723 + $0x3c] sm:$0xf]
      %v756 = vunpack.c.l.b16 %v724
      %v757 = vunpack.c.l.b16 %v725
      %v758 = vunpack.c.l.b16 %v726
      %v759 = vunpack.c.l.b16 %v727
      %v760 = vunpack.c.l.b16 %v728
      %v761 = vunpack.c.l.b16 %v729
      %v762 = vunpack.c.l.b16 %v730
      %v763 = vunpack.c.l.b16 %v731
      %v764 = vunpack.c.l.b16 %v732
      %v765 = vunpack.c.l.b16 %v733
      %v766 = vunpack.c.l.b16 %v734
      %v767 = vunpack.c.l.b16 %v735
      %v768 = vunpack.c.l.b16 %v736
      %v769 = vunpack.c.l.b16 %v737
      %v770 = vunpack.c.l.b16 %v738
      %v771 = vunpack.c.l.b16 %v739
      %v772 = vpack.c.b16 %v757, %v756
      %v773 = vpack.c.b16 %v759, %v758
      %v774 = vpack.c.b16 %v761, %v760
      %v775 = vpack.c.b16 %v763, %v762
      %v776 = vpack.c.b16 %v765, %v764
      %v777 = vpack.c.b16 %v767, %v766
      %v778 = vpack.c.b16 %v769, %v768
      %v779 = vpack.c.b16 %v771, %v770
      %788 = vmatpush.bf16.msra.mxu0 %v779
      %789 = vmatpush.bf16.msra.mxu0 %v778
      %790 = vmatpush.bf16.msra.mxu0 %v777
      %791 = vmatpush.bf16.msra.mxu0 %v776
      %792 = vmatpush.bf16.msra.mxu0 %v775
      %793 = vmatpush.bf16.msra.mxu0 %v774
      %794 = vmatpush.bf16.msra.mxu0 %v773
      %795 = vmatpush.bf16.msra.mxu0 %v772
      %796 = vmatmul.bf16.gmra.mxu0 %v719
      %v797 = vpop.f32.mrf.mxu0
      %v798 = vadd.f32 0.0, %v797
      %v799 = vpop.f32.mrf.mxu0
      %v800 = vadd.f32 0.0, %v799
      %801 = vmatmul.bf16.gmra.mxu0 %v720
      %v802 = vpop.f32.mrf.mxu0
      %v803 = vadd.f32 0.0, %v802
      %v804 = vpop.f32.mrf.mxu0
      %v805 = vadd.f32 0.0, %v804
      %806 = vmatmul.bf16.gmra.mxu0 %v721
      %v807 = vpop.f32.mrf.mxu0
      %v808 = vadd.f32 0.0, %v807
      %v809 = vpop.f32.mrf.mxu0
      %v810 = vadd.f32 0.0, %v809
      %811 = vmatmul.bf16.gmra.mxu0 %v722
      %v812 = vpop.f32.mrf.mxu0
      %v813 = vadd.f32 0.0, %v812
      %v814 = vpop.f32.mrf.mxu0
      %v815 = vadd.f32 0.0, %v814
      %816 = vdwg.mxu0
      %v817 = vadd.f32 %v692, %v798
      %v818 = vadd.f32 %v694, %v800
      %v819 = vadd.f32 %v697, %v803
      %v820 = vadd.f32 %v699, %v805
      %v821 = vadd.f32 %v702, %v808
      %v822 = vadd.f32 %v704, %v810
      %v823 = vadd.f32 %v707, %v813
      %v824 = vadd.f32 %v709, %v815
      %v825 = vld [vmem:[%s491] sm:$0xff]
      %v826 = vld [vmem:[%s491 + $0x10] sm:$0xff]
      %v827 = vld [vmem:[%s491 + $0x20] sm:$0xff]
      %v828 = vld [vmem:[%s491 + $0x30] sm:$0xff]
      %v829 = vld [vmem:[%s491 + $0x40] sm:$0xff]
      %v830 = vld [vmem:[%s491 + $0x50] sm:$0xff]
      %v831 = vld [vmem:[%s491 + $0x60] sm:$0xff]
      %v832 = vld [vmem:[%s491 + $0x70] sm:$0xff]
      %v833 = vpack.c.bf16 %v826, %v825
      %v834 = vpack.c.bf16 %v828, %v827
      %v835 = vpack.c.bf16 %v830, %v829
      %v836 = vpack.c.bf16 %v832, %v831
      %s837 = scalar_lea.vmem %s3, 192
      %v838 = vld [vmem:[%s837] sm:$0xf]
      %v839 = vld [vmem:[%s837 + $0x4] sm:$0xf]
      %v840 = vld [vmem:[%s837 + $0x8] sm:$0xf]
      %v841 = vld [vmem:[%s837 + $0xc] sm:$0xf]
      %v842 = vld [vmem:[%s837 + $0x10] sm:$0xf]
      %v843 = vld [vmem:[%s837 + $0x14] sm:$0xf]
      %v844 = vld [vmem:[%s837 + $0x18] sm:$0xf]
      %v845 = vld [vmem:[%s837 + $0x1c] sm:$0xf]
      %v846 = vld [vmem:[%s837 + $0x20] sm:$0xf]
      %v847 = vld [vmem:[%s837 + $0x24] sm:$0xf]
      %v848 = vld [vmem:[%s837 + $0x28] sm:$0xf]
      %v849 = vld [vmem:[%s837 + $0x2c] sm:$0xf]
      %v850 = vld [vmem:[%s837 + $0x30] sm:$0xf]
      %v851 = vld [vmem:[%s837 + $0x34] sm:$0xf]
      %v852 = vld [vmem:[%s837 + $0x38] sm:$0xf]
      %v853 = vld [vmem:[%s837 + $0x3c] sm:$0xf]
      %v870 = vunpack.c.l.b16 %v838
      %v871 = vunpack.c.l.b16 %v839
      %v872 = vunpack.c.l.b16 %v840
      %v873 = vunpack.c.l.b16 %v841
      %v874 = vunpack.c.l.b16 %v842
      %v875 = vunpack.c.l.b16 %v843
      %v876 = vunpack.c.l.b16 %v844
      %v877 = vunpack.c.l.b16 %v845
      %v878 = vunpack.c.l.b16 %v846
      %v879 = vunpack.c.l.b16 %v847
      %v880 = vunpack.c.l.b16 %v848
      %v881 = vunpack.c.l.b16 %v849
      %v882 = vunpack.c.l.b16 %v850
      %v883 = vunpack.c.l.b16 %v851
      %v884 = vunpack.c.l.b16 %v852
      %v885 = vunpack.c.l.b16 %v853
      %v886 = vpack.c.b16 %v871, %v870
      %v887 = vpack.c.b16 %v873, %v872
      %v888 = vpack.c.b16 %v875, %v874
      %v889 = vpack.c.b16 %v877, %v876
      %v890 = vpack.c.b16 %v879, %v878
      %v891 = vpack.c.b16 %v881, %v880
      %v892 = vpack.c.b16 %v883, %v882
      %v893 = vpack.c.b16 %v885, %v884
      %902 = vmatpush.bf16.msra.mxu0 %v893
      %903 = vmatpush.bf16.msra.mxu0 %v892
      %904 = vmatpush.bf16.msra.mxu0 %v891
      %905 = vmatpush.bf16.msra.mxu0 %v890
      %906 = vmatpush.bf16.msra.mxu0 %v889
      %907 = vmatpush.bf16.msra.mxu0 %v888
      %908 = vmatpush.bf16.msra.mxu0 %v887
      %909 = vmatpush.bf16.msra.mxu0 %v886
      %910 = vmatmul.bf16.gmra.mxu0 %v833
      %v911 = vpop.f32.mrf.mxu0
      %v912 = vadd.f32 0.0, %v911
      %v913 = vpop.f32.mrf.mxu0
      %v914 = vadd.f32 0.0, %v913
      %915 = vmatmul.bf16.gmra.mxu0 %v834
      %v916 = vpop.f32.mrf.mxu0
      %v917 = vadd.f32 0.0, %v916
      %v918 = vpop.f32.mrf.mxu0
      %v919 = vadd.f32 0.0, %v918
      %920 = vmatmul.bf16.gmra.mxu0 %v835
      %v921 = vpop.f32.mrf.mxu0
      %v922 = vadd.f32 0.0, %v921
      %v923 = vpop.f32.mrf.mxu0
      %v924 = vadd.f32 0.0, %v923
      %925 = vmatmul.bf16.gmra.mxu0 %v836
      %v926 = vpop.f32.mrf.mxu0
      %v927 = vadd.f32 0.0, %v926
      %v928 = vpop.f32.mrf.mxu0
      %v929 = vadd.f32 0.0, %v928
      %930 = vdwg.mxu0
      %v931 = vadd.f32 %v817, %v912
      %v932 = vadd.f32 %v818, %v914
      %v933 = vadd.f32 %v819, %v917
      %v934 = vadd.f32 %v820, %v919
      %v935 = vadd.f32 %v821, %v922
      %v936 = vadd.f32 %v822, %v924
      %v937 = vadd.f32 %v823, %v927
      %v938 = vadd.f32 %v824, %v929
      %v939 = vld [vmem:[%s491 + $0x1] sm:$0xff]
      %v940 = vld [vmem:[%s491 + $0x11] sm:$0xff]
      %v941 = vld [vmem:[%s491 + $0x21] sm:$0xff]
      %v942 = vld [vmem:[%s491 + $0x31] sm:$0xff]
      %v943 = vld [vmem:[%s491 + $0x41] sm:$0xff]
      %v944 = vld [vmem:[%s491 + $0x51] sm:$0xff]
      %v945 = vld [vmem:[%s491 + $0x61] sm:$0xff]
      %v946 = vld [vmem:[%s491 + $0x71] sm:$0xff]
      %v947 = vpack.c.bf16 %v940, %v939
      %v948 = vpack.c.bf16 %v942, %v941
      %v949 = vpack.c.bf16 %v944, %v943
      %v950 = vpack.c.bf16 %v946, %v945
      %s951 = scalar_lea.vmem %s3, 256
      %v952 = vld [vmem:[%s951] sm:$0xf]
      %v953 = vld [vmem:[%s951 + $0x4] sm:$0xf]
      %v954 = vld [vmem:[%s951 + $0x8] sm:$0xf]
      %v955 = vld [vmem:[%s951 + $0xc] sm:$0xf]
      %v956 = vld [vmem:[%s951 + $0x10] sm:$0xf]
      %v957 = vld [vmem:[%s951 + $0x14] sm:$0xf]
      %v958 = vld [vmem:[%s951 + $0x18] sm:$0xf]
      %v959 = vld [vmem:[%s951 + $0x1c] sm:$0xf]
      %v960 = vld [vmem:[%s951 + $0x20] sm:$0xf]
      %v961 = vld [vmem:[%s951 + $0x24] sm:$0xf]
      %v962 = vld [vmem:[%s951 + $0x28] sm:$0xf]
      %v963 = vld [vmem:[%s951 + $0x2c] sm:$0xf]
      %v964 = vld [vmem:[%s951 + $0x30] sm:$0xf]
      %v965 = vld [vmem:[%s951 + $0x34] sm:$0xf]
      %v966 = vld [vmem:[%s951 + $0x38] sm:$0xf]
      %v967 = vld [vmem:[%s951 + $0x3c] sm:$0xf]
      %v984 = vunpack.c.l.b16 %v952
      %v985 = vunpack.c.l.b16 %v953
      %v986 = vunpack.c.l.b16 %v954
      %v987 = vunpack.c.l.b16 %v955
      %v988 = vunpack.c.l.b16 %v956
      %v989 = vunpack.c.l.b16 %v957
      %v990 = vunpack.c.l.b16 %v958
      %v991 = vunpack.c.l.b16 %v959
      %v992 = vunpack.c.l.b16 %v960
      %v993 = vunpack.c.l.b16 %v961
      %v994 = vunpack.c.l.b16 %v962
      %v995 = vunpack.c.l.b16 %v963
      %v996 = vunpack.c.l.b16 %v964
      %v997 = vunpack.c.l.b16 %v965
      %v998 = vunpack.c.l.b16 %v966
      %v999 = vunpack.c.l.b16 %v967
      %v1000 = vpack.c.b16 %v985, %v984
      %v1001 = vpack.c.b16 %v987, %v986
      %v1002 = vpack.c.b16 %v989, %v988
      %v1003 = vpack.c.b16 %v991, %v990
      %v1004 = vpack.c.b16 %v993, %v992
      %v1005 = vpack.c.b16 %v995, %v994
      %v1006 = vpack.c.b16 %v997, %v996
      %v1007 = vpack.c.b16 %v999, %v998
      %1016 = vmatpush.bf16.msra.mxu0 %v1007
      %1017 = vmatpush.bf16.msra.mxu0 %v1006
      %1018 = vmatpush.bf16.msra.mxu0 %v1005
      %1019 = vmatpush.bf16.msra.mxu0 %v1004
      %1020 = vmatpush.bf16.msra.mxu0 %v1003
      %1021 = vmatpush.bf16.msra.mxu0 %v1002
      %1022 = vmatpush.bf16.msra.mxu0 %v1001
      %1023 = vmatpush.bf16.msra.mxu0 %v1000
      %1024 = vmatmul.bf16.gmra.mxu0 %v947
      %v1025 = vpop.f32.mrf.mxu0
      %v1026 = vadd.f32 0.0, %v1025
      %v1027 = vpop.f32.mrf.mxu0
      %v1028 = vadd.f32 0.0, %v1027
      %1029 = vmatmul.bf16.gmra.mxu0 %v948
      %v1030 = vpop.f32.mrf.mxu0
      %v1031 = vadd.f32 0.0, %v1030
      %v1032 = vpop.f32.mrf.mxu0
      %v1033 = vadd.f32 0.0, %v1032
      %1034 = vmatmul.bf16.gmra.mxu0 %v949
      %v1035 = vpop.f32.mrf.mxu0
      %v1036 = vadd.f32 0.0, %v1035
      %v1037 = vpop.f32.mrf.mxu0
      %v1038 = vadd.f32 0.0, %v1037
      %1039 = vmatmul.bf16.gmra.mxu0 %v950
      %v1040 = vpop.f32.mrf.mxu0
      %v1041 = vadd.f32 0.0, %v1040
      %v1042 = vpop.f32.mrf.mxu0
      %v1043 = vadd.f32 0.0, %v1042
      %1044 = vdwg.mxu0
      %v1045 = vadd.f32 %v931, %v1026
      %v1046 = vadd.f32 %v932, %v1028
      %v1047 = vadd.f32 %v933, %v1031
      %v1048 = vadd.f32 %v934, %v1033
      %v1049 = vadd.f32 %v935, %v1036
      %v1050 = vadd.f32 %v936, %v1038
      %v1051 = vadd.f32 %v937, %v1041
      %v1052 = vadd.f32 %v938, %v1043
      %v1053 = vld [vmem:[%s491 + $0x2] sm:$0xff]
      %v1054 = vld [vmem:[%s491 + $0x12] sm:$0xff]
      %v1055 = vld [vmem:[%s491 + $0x22] sm:$0xff]
      %v1056 = vld [vmem:[%s491 + $0x32] sm:$0xff]
      %v1057 = vld [vmem:[%s491 + $0x42] sm:$0xff]
      %v1058 = vld [vmem:[%s491 + $0x52] sm:$0xff]
      %v1059 = vld [vmem:[%s491 + $0x62] sm:$0xff]
      %v1060 = vld [vmem:[%s491 + $0x72] sm:$0xff]
      %v1061 = vpack.c.bf16 %v1054, %v1053
      %v1062 = vpack.c.bf16 %v1056, %v1055
      %v1063 = vpack.c.bf16 %v1058, %v1057
      %v1064 = vpack.c.bf16 %v1060, %v1059
      %s1065 = scalar_lea.vmem %s3, 320
      %v1066 = vld [vmem:[%s1065] sm:$0xf]
      %v1067 = vld [vmem:[%s1065 + $0x4] sm:$0xf]
      %v1068 = vld [vmem:[%s1065 + $0x8] sm:$0xf]
      %v1069 = vld [vmem:[%s1065 + $0xc] sm:$0xf]
      %v1070 = vld [vmem:[%s1065 + $0x10] sm:$0xf]
      %v1071 = vld [vmem:[%s1065 + $0x14] sm:$0xf]
      %v1072 = vld [vmem:[%s1065 + $0x18] sm:$0xf]
      %v1073 = vld [vmem:[%s1065 + $0x1c] sm:$0xf]
      %v1074 = vld [vmem:[%s1065 + $0x20] sm:$0xf]
      %v1075 = vld [vmem:[%s1065 + $0x24] sm:$0xf]
      %v1076 = vld [vmem:[%s1065 + $0x28] sm:$0xf]
      %v1077 = vld [vmem:[%s1065 + $0x2c] sm:$0xf]
      %v1078 = vld [vmem:[%s1065 + $0x30] sm:$0xf]
      %v1079 = vld [vmem:[%s1065 + $0x34] sm:$0xf]
      %v1080 = vld [vmem:[%s1065 + $0x38] sm:$0xf]
      %v1081 = vld [vmem:[%s1065 + $0x3c] sm:$0xf]
      %v1098 = vunpack.c.l.b16 %v1066
      %v1099 = vunpack.c.l.b16 %v1067
      %v1100 = vunpack.c.l.b16 %v1068
      %v1101 = vunpack.c.l.b16 %v1069
      %v1102 = vunpack.c.l.b16 %v1070
      %v1103 = vunpack.c.l.b16 %v1071
      %v1104 = vunpack.c.l.b16 %v1072
      %v1105 = vunpack.c.l.b16 %v1073
      %v1106 = vunpack.c.l.b16 %v1074
      %v1107 = vunpack.c.l.b16 %v1075
      %v1108 = vunpack.c.l.b16 %v1076
      %v1109 = vunpack.c.l.b16 %v1077
      %v1110 = vunpack.c.l.b16 %v1078
      %v1111 = vunpack.c.l.b16 %v1079
      %v1112 = vunpack.c.l.b16 %v1080
      %v1113 = vunpack.c.l.b16 %v1081
      %v1114 = vpack.c.b16 %v1099, %v1098
      %v1115 = vpack.c.b16 %v1101, %v1100
      %v1116 = vpack.c.b16 %v1103, %v1102
      %v1117 = vpack.c.b16 %v1105, %v1104
      %v1118 = vpack.c.b16 %v1107, %v1106
      %v1119 = vpack.c.b16 %v1109, %v1108
      %v1120 = vpack.c.b16 %v1111, %v1110
      %v1121 = vpack.c.b16 %v1113, %v1112
      %1130 = vmatpush.bf16.msra.mxu0 %v1121
      %1131 = vmatpush.bf16.msra.mxu0 %v1120
      %1132 = vmatpush.bf16.msra.mxu0 %v1119
      %1133 = vmatpush.bf16.msra.mxu0 %v1118
      %1134 = vmatpush.bf16.msra.mxu0 %v1117
      %1135 = vmatpush.bf16.msra.mxu0 %v1116
      %1136 = vmatpush.bf16.msra.mxu0 %v1115
      %1137 = vmatpush.bf16.msra.mxu0 %v1114
      %1138 = vmatmul.bf16.gmra.mxu0 %v1061
      %v1139 = vpop.f32.mrf.mxu0
      %v1140 = vadd.f32 0.0, %v1139
      %v1141 = vpop.f32.mrf.mxu0
      %v1142 = vadd.f32 0.0, %v1141
      %1143 = vmatmul.bf16.gmra.mxu0 %v1062
      %v1144 = vpop.f32.mrf.mxu0
      %v1145 = vadd.f32 0.0, %v1144
      %v1146 = vpop.f32.mrf.mxu0
      %v1147 = vadd.f32 0.0, %v1146
      %1148 = vmatmul.bf16.gmra.mxu0 %v1063
      %v1149 = vpop.f32.mrf.mxu0
      %v1150 = vadd.f32 0.0, %v1149
      %v1151 = vpop.f32.mrf.mxu0
      %v1152 = vadd.f32 0.0, %v1151
      %1153 = vmatmul.bf16.gmra.mxu0 %v1064
      %v1154 = vpop.f32.mrf.mxu0
      %v1155 = vadd.f32 0.0, %v1154
      %v1156 = vpop.f32.mrf.mxu0
      %v1157 = vadd.f32 0.0, %v1156
      %1158 = vdwg.mxu0
      %v1159 = vadd.f32 %v1045, %v1140
      %v1160 = vadd.f32 %v1046, %v1142
      %v1161 = vadd.f32 %v1047, %v1145
      %v1162 = vadd.f32 %v1048, %v1147
      %v1163 = vadd.f32 %v1049, %v1150
      %v1164 = vadd.f32 %v1050, %v1152
      %v1165 = vadd.f32 %v1051, %v1155
      %v1166 = vadd.f32 %v1052, %v1157
      %s1167 = scalar_lea.vmem [#allocation2], 32
      %v1168 = vld [vmem:[%s1167] sm:$0xff]
      %v1169 = vld [vmem:[%s1167 + $0x10] sm:$0xff]
      %v1170 = vld [vmem:[%s1167 + $0x20] sm:$0xff]
      %v1171 = vld [vmem:[%s1167 + $0x30] sm:$0xff]
      %v1172 = vld [vmem:[%s1167 + $0x40] sm:$0xff]
      %v1173 = vld [vmem:[%s1167 + $0x50] sm:$0xff]
      %v1174 = vld [vmem:[%s1167 + $0x60] sm:$0xff]
      %v1175 = vld [vmem:[%s1167 + $0x70] sm:$0xff]
      %v1176 = vpack.c.bf16 %v1169, %v1168
      %v1177 = vpack.c.bf16 %v1171, %v1170
      %v1178 = vpack.c.bf16 %v1173, %v1172
      %v1179 = vpack.c.bf16 %v1175, %v1174
      %s1180 = scalar_lea.vmem %s3, 384
      %v1181 = vld [vmem:[%s1180] sm:$0xf]
      %v1182 = vld [vmem:[%s1180 + $0x4] sm:$0xf]
      %v1183 = vld [vmem:[%s1180 + $0x8] sm:$0xf]
      %v1184 = vld [vmem:[%s1180 + $0xc] sm:$0xf]
      %v1185 = vld [vmem:[%s1180 + $0x10] sm:$0xf]
      %v1186 = vld [vmem:[%s1180 + $0x14] sm:$0xf]
      %v1187 = vld [vmem:[%s1180 + $0x18] sm:$0xf]
      %v1188 = vld [vmem:[%s1180 + $0x1c] sm:$0xf]
      %v1189 = vld [vmem:[%s1180 + $0x20] sm:$0xf]
      %v1190 = vld [vmem:[%s1180 + $0x24] sm:$0xf]
      %v1191 = vld [vmem:[%s1180 + $0x28] sm:$0xf]
      %v1192 = vld [vmem:[%s1180 + $0x2c] sm:$0xf]
      %v1193 = vld [vmem:[%s1180 + $0x30] sm:$0xf]
      %v1194 = vld [vmem:[%s1180 + $0x34] sm:$0xf]
      %v1195 = vld [vmem:[%s1180 + $0x38] sm:$0xf]
      %v1196 = vld [vmem:[%s1180 + $0x3c] sm:$0xf]
      %v1213 = vunpack.c.l.b16 %v1181
      %v1214 = vunpack.c.l.b16 %v1182
      %v1215 = vunpack.c.l.b16 %v1183
      %v1216 = vunpack.c.l.b16 %v1184
      %v1217 = vunpack.c.l.b16 %v1185
      %v1218 = vunpack.c.l.b16 %v1186
      %v1219 = vunpack.c.l.b16 %v1187
      %v1220 = vunpack.c.l.b16 %v1188
      %v1221 = vunpack.c.l.b16 %v1189
      %v1222 = vunpack.c.l.b16 %v1190
      %v1223 = vunpack.c.l.b16 %v1191
      %v1224 = vunpack.c.l.b16 %v1192
      %v1225 = vunpack.c.l.b16 %v1193
      %v1226 = vunpack.c.l.b16 %v1194
      %v1227 = vunpack.c.l.b16 %v1195
      %v1228 = vunpack.c.l.b16 %v1196
      %v1229 = vpack.c.b16 %v1214, %v1213
      %v1230 = vpack.c.b16 %v1216, %v1215
      %v1231 = vpack.c.b16 %v1218, %v1217
      %v1232 = vpack.c.b16 %v1220, %v1219
      %v1233 = vpack.c.b16 %v1222, %v1221
      %v1234 = vpack.c.b16 %v1224, %v1223
      %v1235 = vpack.c.b16 %v1226, %v1225
      %v1236 = vpack.c.b16 %v1228, %v1227
      %1245 = vmatpush.bf16.msra.mxu0 %v1236
      %1246 = vmatpush.bf16.msra.mxu0 %v1235
      %1247 = vmatpush.bf16.msra.mxu0 %v1234
      %1248 = vmatpush.bf16.msra.mxu0 %v1233
      %1249 = vmatpush.bf16.msra.mxu0 %v1232
      %1250 = vmatpush.bf16.msra.mxu0 %v1231
      %1251 = vmatpush.bf16.msra.mxu0 %v1230
      %1252 = vmatpush.bf16.msra.mxu0 %v1229
      %1253 = vmatmul.bf16.gmra.mxu0 %v1176
      %v1254 = vpop.f32.mrf.mxu0
      %v1255 = vadd.f32 0.0, %v1254
      %v1256 = vpop.f32.mrf.mxu0
      %v1257 = vadd.f32 0.0, %v1256
      %1258 = vmatmul.bf16.gmra.mxu0 %v1177
      %v1259 = vpop.f32.mrf.mxu0
      %v1260 = vadd.f32 0.0, %v1259
      %v1261 = vpop.f32.mrf.mxu0
      %v1262 = vadd.f32 0.0, %v1261
      %1263 = vmatmul.bf16.gmra.mxu0 %v1178
      %v1264 = vpop.f32.mrf.mxu0
      %v1265 = vadd.f32 0.0, %v1264
      %v1266 = vpop.f32.mrf.mxu0
      %v1267 = vadd.f32 0.0, %v1266
      %1268 = vmatmul.bf16.gmra.mxu0 %v1179
      %v1269 = vpop.f32.mrf.mxu0
      %v1270 = vadd.f32 0.0, %v1269
      %v1271 = vpop.f32.mrf.mxu0
      %v1272 = vadd.f32 0.0, %v1271
      %1273 = vdwg.mxu0
      %v1274 = vadd.f32 %v1159, %v1255
      %v1275 = vadd.f32 %v1160, %v1257
      %v1276 = vadd.f32 %v1161, %v1260
      %v1277 = vadd.f32 %v1162, %v1262
      %v1278 = vadd.f32 %v1163, %v1265
      %v1279 = vadd.f32 %v1164, %v1267
      %v1280 = vadd.f32 %v1165, %v1270
      %v1281 = vadd.f32 %v1166, %v1272
      %v1282 = vld [vmem:[%s1167 + $0x1] sm:$0xff]
      %v1283 = vld [vmem:[%s1167 + $0x11] sm:$0xff]
      %v1284 = vld [vmem:[%s1167 + $0x21] sm:$0xff]
      %v1285 = vld [vmem:[%s1167 + $0x31] sm:$0xff]
      %v1286 = vld [vmem:[%s1167 + $0x41] sm:$0xff]
      %v1287 = vld [vmem:[%s1167 + $0x51] sm:$0xff]
      %v1288 = vld [vmem:[%s1167 + $0x61] sm:$0xff]
      %v1289 = vld [vmem:[%s1167 + $0x71] sm:$0xff]
      %v1290 = vpack.c.bf16 %v1283, %v1282
      %v1291 = vpack.c.bf16 %v1285, %v1284
      %v1292 = vpack.c.bf16 %v1287, %v1286
      %v1293 = vpack.c.bf16 %v1289, %v1288
      %s1294 = scalar_lea.vmem %s3, 448
      %v1295 = vld [vmem:[%s1294] sm:$0xf]
      %v1296 = vld [vmem:[%s1294 + $0x4] sm:$0xf]
      %v1297 = vld [vmem:[%s1294 + $0x8] sm:$0xf]
      %v1298 = vld [vmem:[%s1294 + $0xc] sm:$0xf]
      %v1299 = vld [vmem:[%s1294 + $0x10] sm:$0xf]
      %v1300 = vld [vmem:[%s1294 + $0x14] sm:$0xf]
      %v1301 = vld [vmem:[%s1294 + $0x18] sm:$0xf]
      %v1302 = vld [vmem:[%s1294 + $0x1c] sm:$0xf]
      %v1303 = vld [vmem:[%s1294 + $0x20] sm:$0xf]
      %v1304 = vld [vmem:[%s1294 + $0x24] sm:$0xf]
      %v1305 = vld [vmem:[%s1294 + $0x28] sm:$0xf]
      %v1306 = vld [vmem:[%s1294 + $0x2c] sm:$0xf]
      %v1307 = vld [vmem:[%s1294 + $0x30] sm:$0xf]
      %v1308 = vld [vmem:[%s1294 + $0x34] sm:$0xf]
      %v1309 = vld [vmem:[%s1294 + $0x38] sm:$0xf]
      %v1310 = vld [vmem:[%s1294 + $0x3c] sm:$0xf]
      %v1327 = vunpack.c.l.b16 %v1295
      %v1328 = vunpack.c.l.b16 %v1296
      %v1329 = vunpack.c.l.b16 %v1297
      %v1330 = vunpack.c.l.b16 %v1298
      %v1331 = vunpack.c.l.b16 %v1299
      %v1332 = vunpack.c.l.b16 %v1300
      %v1333 = vunpack.c.l.b16 %v1301
      %v1334 = vunpack.c.l.b16 %v1302
      %v1335 = vunpack.c.l.b16 %v1303
      %v1336 = vunpack.c.l.b16 %v1304
      %v1337 = vunpack.c.l.b16 %v1305
      %v1338 = vunpack.c.l.b16 %v1306
      %v1339 = vunpack.c.l.b16 %v1307
      %v1340 = vunpack.c.l.b16 %v1308
      %v1341 = vunpack.c.l.b16 %v1309
      %v1342 = vunpack.c.l.b16 %v1310
      %v1343 = vpack.c.b16 %v1328, %v1327
      %v1344 = vpack.c.b16 %v1330, %v1329
      %v1345 = vpack.c.b16 %v1332, %v1331
      %v1346 = vpack.c.b16 %v1334, %v1333
      %v1347 = vpack.c.b16 %v1336, %v1335
      %v1348 = vpack.c.b16 %v1338, %v1337
      %v1349 = vpack.c.b16 %v1340, %v1339
      %v1350 = vpack.c.b16 %v1342, %v1341
      %1359 = vmatpush.bf16.msra.mxu0 %v1350
      %1360 = vmatpush.bf16.msra.mxu0 %v1349
      %1361 = vmatpush.bf16.msra.mxu0 %v1348
      %1362 = vmatpush.bf16.msra.mxu0 %v1347
      %1363 = vmatpush.bf16.msra.mxu0 %v1346
      %1364 = vmatpush.bf16.msra.mxu0 %v1345
      %1365 = vmatpush.bf16.msra.mxu0 %v1344
      %1366 = vmatpush.bf16.msra.mxu0 %v1343
      %1367 = vmatmul.bf16.gmra.mxu0 %v1290
      %v1368 = vpop.f32.mrf.mxu0
      %v1369 = vadd.f32 0.0, %v1368
      %v1370 = vpop.f32.mrf.mxu0
      %v1371 = vadd.f32 0.0, %v1370
      %1372 = vmatmul.bf16.gmra.mxu0 %v1291
      %v1373 = vpop.f32.mrf.mxu0
      %v1374 = vadd.f32 0.0, %v1373
      %v1375 = vpop.f32.mrf.mxu0
      %v1376 = vadd.f32 0.0, %v1375
      %1377 = vmatmul.bf16.gmra.mxu0 %v1292
      %v1378 = vpop.f32.mrf.mxu0
      %v1379 = vadd.f32 0.0, %v1378
      %v1380 = vpop.f32.mrf.mxu0
      %v1381 = vadd.f32 0.0, %v1380
      %1382 = vmatmul.bf16.gmra.mxu0 %v1293
      %v1383 = vpop.f32.mrf.mxu0
      %v1384 = vadd.f32 0.0, %v1383
      %v1385 = vpop.f32.mrf.mxu0
      %v1386 = vadd.f32 0.0, %v1385
      %1387 = vdwg.mxu0
      %v1388 = vadd.f32 %v1274, %v1369
      %v1389 = vadd.f32 %v1275, %v1371
      %v1390 = vadd.f32 %v1276, %v1374
      %v1391 = vadd.f32 %v1277, %v1376
      %v1392 = vadd.f32 %v1278, %v1379
      %v1393 = vadd.f32 %v1279, %v1381
      %v1394 = vadd.f32 %v1280, %v1384
      %v1395 = vadd.f32 %v1281, %v1386
      %v1396 = vld [vmem:[%s1167 + $0x2] sm:$0xff]
      %v1397 = vld [vmem:[%s1167 + $0x12] sm:$0xff]
      %v1398 = vld [vmem:[%s1167 + $0x22] sm:$0xff]
      %v1399 = vld [vmem:[%s1167 + $0x32] sm:$0xff]
      %v1400 = vld [vmem:[%s1167 + $0x42] sm:$0xff]
      %v1401 = vld [vmem:[%s1167 + $0x52] sm:$0xff]
      %v1402 = vld [vmem:[%s1167 + $0x62] sm:$0xff]
      %v1403 = vld [vmem:[%s1167 + $0x72] sm:$0xff]
      %v1404 = vpack.c.bf16 %v1397, %v1396
      %v1405 = vpack.c.bf16 %v1399, %v1398
      %v1406 = vpack.c.bf16 %v1401, %v1400
      %v1407 = vpack.c.bf16 %v1403, %v1402
      %s1408 = scalar_lea.vmem %s3, 512
      %v1409 = vld [vmem:[%s1408] sm:$0xf]
      %v1410 = vld [vmem:[%s1408 + $0x4] sm:$0xf]
      %v1411 = vld [vmem:[%s1408 + $0x8] sm:$0xf]
      %v1412 = vld [vmem:[%s1408 + $0xc] sm:$0xf]
      %v1413 = vld [vmem:[%s1408 + $0x10] sm:$0xf]
      %v1414 = vld [vmem:[%s1408 + $0x14] sm:$0xf]
      %v1415 = vld [vmem:[%s1408 + $0x18] sm:$0xf]
      %v1416 = vld [vmem:[%s1408 + $0x1c] sm:$0xf]
      %v1417 = vld [vmem:[%s1408 + $0x20] sm:$0xf]
      %v1418 = vld [vmem:[%s1408 + $0x24] sm:$0xf]
      %v1419 = vld [vmem:[%s1408 + $0x28] sm:$0xf]
      %v1420 = vld [vmem:[%s1408 + $0x2c] sm:$0xf]
      %v1421 = vld [vmem:[%s1408 + $0x30] sm:$0xf]
      %v1422 = vld [vmem:[%s1408 + $0x34] sm:$0xf]
      %v1423 = vld [vmem:[%s1408 + $0x38] sm:$0xf]
      %v1424 = vld [vmem:[%s1408 + $0x3c] sm:$0xf]
      %v1441 = vunpack.c.l.b16 %v1409
      %v1442 = vunpack.c.l.b16 %v1410
      %v1443 = vunpack.c.l.b16 %v1411
      %v1444 = vunpack.c.l.b16 %v1412
      %v1445 = vunpack.c.l.b16 %v1413
      %v1446 = vunpack.c.l.b16 %v1414
      %v1447 = vunpack.c.l.b16 %v1415
      %v1448 = vunpack.c.l.b16 %v1416
      %v1449 = vunpack.c.l.b16 %v1417
      %v1450 = vunpack.c.l.b16 %v1418
      %v1451 = vunpack.c.l.b16 %v1419
      %v1452 = vunpack.c.l.b16 %v1420
      %v1453 = vunpack.c.l.b16 %v1421
      %v1454 = vunpack.c.l.b16 %v1422
      %v1455 = vunpack.c.l.b16 %v1423
      %v1456 = vunpack.c.l.b16 %v1424
      %v1457 = vpack.c.b16 %v1442, %v1441
      %v1458 = vpack.c.b16 %v1444, %v1443
      %v1459 = vpack.c.b16 %v1446, %v1445
      %v1460 = vpack.c.b16 %v1448, %v1447
      %v1461 = vpack.c.b16 %v1450, %v1449
      %v1462 = vpack.c.b16 %v1452, %v1451
      %v1463 = vpack.c.b16 %v1454, %v1453
      %v1464 = vpack.c.b16 %v1456, %v1455
      %1473 = vmatpush.bf16.msra.mxu0 %v1464
      %1474 = vmatpush.bf16.msra.mxu0 %v1463
      %1475 = vmatpush.bf16.msra.mxu0 %v1462
      %1476 = vmatpush.bf16.msra.mxu0 %v1461
      %1477 = vmatpush.bf16.msra.mxu0 %v1460
      %1478 = vmatpush.bf16.msra.mxu0 %v1459
      %1479 = vmatpush.bf16.msra.mxu0 %v1458
      %1480 = vmatpush.bf16.msra.mxu0 %v1457
      %1481 = vmatmul.bf16.gmra.mxu0 %v1404
      %v1482 = vpop.f32.mrf.mxu0
      %v1483 = vadd.f32 0.0, %v1482
      %v1484 = vpop.f32.mrf.mxu0
      %v1485 = vadd.f32 0.0, %v1484
      %1486 = vmatmul.bf16.gmra.mxu0 %v1405
      %v1487 = vpop.f32.mrf.mxu0
      %v1488 = vadd.f32 0.0, %v1487
      %v1489 = vpop.f32.mrf.mxu0
      %v1490 = vadd.f32 0.0, %v1489
      %1491 = vmatmul.bf16.gmra.mxu0 %v1406
      %v1492 = vpop.f32.mrf.mxu0
      %v1493 = vadd.f32 0.0, %v1492
      %v1494 = vpop.f32.mrf.mxu0
      %v1495 = vadd.f32 0.0, %v1494
      %1496 = vmatmul.bf16.gmra.mxu0 %v1407
      %v1497 = vpop.f32.mrf.mxu0
      %v1498 = vadd.f32 0.0, %v1497
      %v1499 = vpop.f32.mrf.mxu0
      %v1500 = vadd.f32 0.0, %v1499
      %1501 = vdwg.mxu0
      %v1502 = vadd.f32 %v1388, %v1483
      %v1503 = vadd.f32 %v1389, %v1485
      %v1504 = vadd.f32 %v1390, %v1488
      %v1505 = vadd.f32 %v1391, %v1490
      %v1506 = vadd.f32 %v1392, %v1493
      %v1507 = vadd.f32 %v1393, %v1495
      %v1508 = vadd.f32 %v1394, %v1498
      %v1509 = vadd.f32 %v1395, %v1500
      %v1510 = vld [vmem:[%s4] sm:$0x1]
      %v1512 = vperm.slane %v1510, 0
      %v1514 = vadd.f32 %v1502, %v1512
      %v1515 = vadd.f32 %v1503, %v1512
      %v1516 = vadd.f32 %v1504, %v1512
      %v1517 = vadd.f32 %v1505, %v1512
      %v1518 = vadd.f32 %v1506, %v1512
      %v1519 = vadd.f32 %v1507, %v1512
      %v1520 = vadd.f32 %v1508, %v1512
      %v1521 = vadd.f32 %v1509, %v1512
      %v1522 = vmax.f32 %v1514, 0.0
      %v1523 = vmax.f32 %v1515, 0.0
      %v1524 = vmax.f32 %v1516, 0.0
      %v1525 = vmax.f32 %v1517, 0.0
      %v1526 = vmax.f32 %v1518, 0.0
      %v1527 = vmax.f32 %v1519, 0.0
      %v1528 = vmax.f32 %v1520, 0.0
      %v1529 = vmax.f32 %v1521, 0.0
      %1530 = vst [vmem:[%s224] sm:$0xff] %v1522
      %1531 = vst [vmem:[%s224 + $0x8] sm:$0xff] %v1523
      %1532 = vst [vmem:[%s224 + $0x10] sm:$0xff] %v1524
      %1533 = vst [vmem:[%s224 + $0x18] sm:$0xff] %v1525
      %1534 = vst [vmem:[%s224 + $0x20] sm:$0xff] %v1526
      %1535 = vst [vmem:[%s224 + $0x28] sm:$0xff] %v1527
      %1536 = vst [vmem:[%s224 + $0x30] sm:$0xff] %v1528
      %1537 = vst [vmem:[%s224 + $0x38] sm:$0xff] %v1529
      %p1538 = scmp.lt.s32.totalorder %s16, 1
      %s1539 = scalar_select %p1538, %s16, 1
      %s1540 = smul.addr %s1539, 8
      %s1541 = smul.addr %s1540, 8
      %s1542 = scalar_lea.vmem %s5, %s1541
      // Predicated region
      $region41: #{forward.1} parent=39 // pred_check
        %p1543 = pneg %p144
      $region42: #{forward.1} parent=39 // pred_check_branch
        %1545 = sbr.rel (%p1543) target = $region44
      $region43: #{forward.1} parent=39 // pred_region
        _
      $region44: #{forward.1} parent=39 // pred_fallthru
        _
    $region40: #{forward.1} parent=5 // pred_fallthru
      _
    %p1546 = scmp.le.s32.totalorder 2, %s11
    // Predicated region
    $region45: #{forward.1} parent=5 // pred_check
      %p1547 = pneg %p1546
    $region46: #{forward.1} parent=5 // pred_check_branch
      %1549 = sbr.rel (%p1547) target = $region48
    $region47: #{forward.1} parent=5 // pred_region
      %s1550 = ssub.s32 %s11, 2
      // Predicated region
      $region49: #{forward.1} parent=47 // pred_check
        %p1551 = pneg %p150
      $region50: #{forward.1} parent=47 // pred_check_branch
        %1553 = sbr.rel (%p1551) target = $region52
      $region51: #{forward.1} parent=47 // pred_region
        %p1554 = scmp.lt.s32.totalorder %s17, 1
        %s1555 = scalar_select %p1554, %s17, 1
        %s1556 = smul.addr %s1555, 8
        %s1557 = smul.addr %s1556, 8
        %s1558 = scalar_lea.vmem %s5, %s1557
      $region52: #{forward.1} parent=47 // pred_fallthru
        _
    $region48: #{forward.1} parent=5 // pred_fallthru
      _
  $region6: #{forward.1} parent=0 // loop_footer
    %s15 = sadd.s32 1, %s11
  $region7: #{forward.1} parent=0 // loop_footer_branch
    %10 = sbr.rel target = $region3
  $region8: #{forward.1} parent=0 // loop_exit
    _

</llo_original>
